<compile_context>
chip_gen: v6e
topology: v6e:2x2x1
jax: 0.10.0
libtpu: 0.0.40
codegen_flags: <defaults>
</compile_context>

<pallas_src>
import functools

import jax
import jax.numpy as jnp
from jax.experimental import pallas as pl
from jax.experimental.pallas import tpu as pltpu


def _round_up(v, m):
    return ((v + m - 1) // m) * m


def _strip_geometry(H, W):
    """Per-resolution (token_offset, h, w, front_pad, scratch_rows)."""
    geo = []
    tok0 = 0
    for h, w in ((2 * H, 2 * W), (H, W), (H // 2, W // 2)):
        pad = _round_up(w + 1, 8)          # >= w+1 halo rows, sublane aligned
        geo.append((tok0, h, w, pad, 2 * pad + h * w))
        tok0 += h * w
    return geo


# -----------------------------------------------------------------------------
# Kernel: 3x3 depthwise conv + bias for all three resolutions of one
# (batch, channel-block) step, done directly in flattened-token space.
# -----------------------------------------------------------------------------
def _dwconv_kernel(x_ref, w_ref, b_ref, o_ref, s1, s2, s3, *, H, W):
    # x_ref: (N, TC) tokens, channels on lanes      o_ref: (N, TC)
    # w_ref: (9, TC) taps (row k = kh*3 + kw)       b_ref: (1, TC)
    # s1/s2/s3: (2*pad_r + h_r*w_r, TC) f32 zero-halo strips (VMEM scratch)
    f32 = jnp.float32
    w9 = w_ref[...].astype(f32)            # cast weights once
    bias = b_ref[...].astype(f32)          # (1, TC), fused into the epilogue

    for scr, (tok0, h, w, pad, _) in zip((s1, s2, s3), _strip_geometry(H, W)):
        T = h * w
        tc = scr.shape[-1]

        # Zero the halo strips every step (cheap VMEM memset; keeps every
        # grid step self-contained so both axes stay safely "parallel").
        z = jnp.zeros((pad, tc), f32)
        scr[0:pad, :] = z
        scr[pad + T:pad + T + pad, :] = z
        # Cast activations to f32 once (hoisted out of the 9-tap loop) and
        # place them in the interior of the halo strip.
        scr[pad:pad + T, :] = x_ref[tok0:tok0 + T, :].astype(f32)

        # A shift by (dh, dw) in image space is a shift by dh*w + dw tokens,
        # except that dw = +/-1 wraps across row boundaries; wrapped columns
        # are masked to zero (dh out-of-range rows land in the zeroed halo).
        col = jax.lax.broadcasted_iota(jnp.int32, (T, 1), 0) % w
        acc = None
        for dw in (-1, 0, 1):
            part = None
            for dh in (-1, 0, 1):
                k = (dh + 1) * 3 + (dw + 1)
                off = pad + dh * w + dw
                # TODO(synk): item 7 - dw != 0 reads are sublane-unaligned;
                # pltpu.roll of an aligned strip would push the shift onto the
                # XLU on v7x.
                tap = scr[off:off + T, :] * w9[k:k + 1, :]
                part = tap if part is None else part + tap
            if dw == -1:
                part = jnp.where(col == 0, 0.0, part)        # left edge
            elif dw == 1:
                part = jnp.where(col == w - 1, 0.0, part)    # right edge
            acc = part if acc is None else acc + part
        # TODO(synk): item 9 - optional bf16 tap math on v6e/v7x (would break
        # strict f32 parity with the PyTorch conv, so kept f32 here).
        o_ref[tok0:tok0 + T, :] = (acc + bias).astype(o_ref.dtype)


# -----------------------------------------------------------------------------
# Shape-derived VMEM budgeting (items 4/5/8)
# -----------------------------------------------------------------------------
_VMEM_BUDGET = 36 * 1024 * 1024   # keep double-buffered blocks well under the
                                  # 64 MiB physical per-TC VMEM of v7x


def _vmem_estimate(N, tc, itemsize, scratch_rows):
    io = 2 * 2 * N * tc * itemsize       # double-buffered input + output block
    scratch = scratch_rows * tc * 4      # f32 halo strips (single-buffered)
    params = 2 * (9 + 1) * tc * 4        # weight + bias blocks
    return io + scratch + params


def _pick_tc(B, N, C, itemsize, scratch_rows):
    if C % 128 != 0:
        return C      # lane-padded full channel extent (e.g. the toy C=32)
    cands = [c for c in range(C, 0, -128) if C % c == 0]
    fits = [c for c in cands
            if _vmem_estimate(N, c, itemsize, scratch_rows) <= _VMEM_BUDGET]
    if not fits:
        # TODO(synk): item 3 - for very large spatial maps add haloed row
        # tiling instead of shrinking the channel block below 128 lanes.
        fits = [cands[-1]]
    for c in fits:    # item 8: prefer an even total grid for the two v7x TCs
        if (B * (C // c)) % 2 == 0:
            return c
    return fits[0]


# -----------------------------------------------------------------------------
# Module forward (matches PyTorch DWConv.forward semantics)
# -----------------------------------------------------------------------------
def dwconv_forward(x, H, W, weight, bias):
    """x: (B, N, C) with N == 21*(H*W//4); weight: (C, 1, 3, 3); bias: (C,)."""
    B, N, C = x.shape
    if H % 2 or W % 2 or N != 21 * ((H * W) // 4):
        raise ValueError(f"bad token/spatial shapes: N={N}, H={H}, W={W}")

    geo = _strip_geometry(H, W)
    scratch_rows = sum(g[-1] for g in geo)
    tc = _pick_tc(B, N, C, x.dtype.itemsize, scratch_rows)
    est = _vmem_estimate(N, tc, x.dtype.itemsize, scratch_rows)
    vmem_limit = int(min(max(est + (8 << 20), 32 << 20), 100 << 20))

    w9c = jnp.transpose(weight.reshape(C, 9))   # (9, C), row k = kh*3 + kw
    b2 = bias.reshape(1, C)

    kernel = functools.partial(_dwconv_kernel, H=H, W=W)
    return pl.pallas_call(
        kernel,
        out_shape=jax.ShapeDtypeStruct((B, N, C), x.dtype),
        grid_spec=pltpu.PrefetchScalarGridSpec(
            num_scalar_prefetch=0,
            grid=(B, C // tc),
            in_specs=[
                pl.BlockSpec((None, N, tc), lambda b, c: (b, 0, c)),
                pl.BlockSpec((9, tc), lambda b, c: (0, c)),
                pl.BlockSpec((1, tc), lambda b, c: (0, c)),
            ],
            out_specs=pl.BlockSpec((None, N, tc), lambda b, c: (b, 0, c)),
            scratch_shapes=[pltpu.VMEM((g[-1], tc), jnp.float32) for g in geo],
        ),
        compiler_params=pltpu.CompilerParams(
            dimension_semantics=("parallel", "parallel"),
            vmem_limit_bytes=vmem_limit,
        ),
    )(x, w9c, b2)


# -----------------------------------------------------------------------------
# Pure-JAX reference (same math, no Pallas, no MXU) for correctness checking
# -----------------------------------------------------------------------------
def _dwconv_nhwc_ref(img, w9c, bias):
    B, h, w, C = img.shape
    xp = jnp.pad(img.astype(jnp.float32), ((0, 0), (1, 1), (1, 1), (0, 0)))
    acc = None
    for kh in range(3):
        for kw in range(3):
            tap = xp[:, kh:kh + h, kw:kw + w, :] * w9c[kh * 3 + kw]
            acc = tap if acc is None else acc + tap
    return acc + bias


def dwconv_forward_ref(x, H, W, weight, bias):
    B, N, C = x.shape
    n = N // 21
    w9c = jnp.transpose(weight.reshape(C, 9)).astype(jnp.float32)
    b = bias.astype(jnp.float32)
    x1 = x[:, :16 * n, :].reshape(B, 2 * H, 2 * W, C)
    x2 = x[:, 16 * n:20 * n, :].reshape(B, H, W, C)
    x3 = x[:, 20 * n:, :].reshape(B, H // 2, W // 2, C)
    ys = [_dwconv_nhwc_ref(xi, w9c, b).reshape(B, -1, C) for xi in (x1, x2, x3)]
    return jnp.concatenate(ys, axis=1).astype(x.dtype)


# -----------------------------------------------------------------------------
if __name__ == "__main__":
    key = jax.random.PRNGKey(0)
    kx, kw, kb = jax.random.split(key, 3)

    B, C, H, W = 2, 32, 8, 8          # small shapes consistent with the module
    n = (H * W) // 4
    N = 21 * n                        # tokens: 16n (2Hx2W) + 4n (HxW) + n

    x = jax.random.normal(kx, (B, N, C), jnp.float32)
    weight = 0.1 * jax.random.normal(kw, (C, 1, 3, 3), jnp.float32)
    bias = 0.1 * jax.random.normal(kb, (C,), jnp.float32)

    fwd = jax.jit(dwconv_forward, static_argnums=(1, 2))
    y = jax.block_until_ready(fwd(x, H, W, weight, bias))

    assert y.shape == (B, N, C), y.shape
    assert bool(jnp.all(jnp.isfinite(y)))

    y_ref = dwconv_forward_ref(x, H, W, weight, bias)
    err = float(jnp.max(jnp.abs(y - y_ref)))
    assert bool(jnp.allclose(y, y_ref, rtol=1e-5, atol=1e-5)), err

    print("KERNEL_OK")
</pallas_src>

<mosaic_0001>
module attributes {stable_mosaic.version = 11 : i64} {
  func.func @_dwconv_kernel(%arg0: i32, %arg1: i32, %arg2: memref<1x336x32xf32, #tpu.memory_space<vmem>>, %arg3: memref<9x32xf32, #tpu.memory_space<vmem>>, %arg4: memref<1x32xf32, #tpu.memory_space<vmem>>, %arg5: memref<1x336x32xf32, #tpu.memory_space<vmem>>, %arg6: memref<304x32xf32, #tpu.memory_space<vmem>>, %arg7: memref<96x32xf32, #tpu.memory_space<vmem>>, %arg8: memref<32x32xf32, #tpu.memory_space<vmem>>) attributes {dimension_semantics = [#tpu.dimension_semantics<parallel>, #tpu.dimension_semantics<parallel>], iteration_bounds = array<i64: 2, 1>, scalar_prefetch = 0 : i64, scratch_operands = 3 : i64, tpu.core_type = #tpu.core_type<tc>, window_params = [{transform_indices = @transform_0, window_bounds = array<i64: 1, 336, 32>}, {transform_indices = @transform_1, window_bounds = array<i64: 9, 32>}, {transform_indices = @transform_2, window_bounds = array<i64: 1, 32>}, {transform_indices = @transform_3, window_bounds = array<i64: 1, 336, 32>}]} {
    %c0 = arith.constant 0 : index
    %c0_0 = arith.constant 0 : index
    %0 = vector.load %arg3[%c0, %c0_0] : memref<9x32xf32, #tpu.memory_space<vmem>>, vector<9x32xf32>
    %c0_1 = arith.constant 0 : index
    %c0_2 = arith.constant 0 : index
    %1 = vector.load %arg4[%c0_1, %c0_2] : memref<1x32xf32, #tpu.memory_space<vmem>>, vector<1x32xf32>
    %cst = arith.constant 0.000000e+00 : f32
    %2 = vector.broadcast %cst : f32 to vector<24x32xf32>
    %c0_3 = arith.constant 0 : index
    %c0_4 = arith.constant 0 : index
    %3 = vector.load %arg6[%c0_3, %c0_4] : memref<304x32xf32, #tpu.memory_space<vmem>>, vector<24x32xf32>
    tpu.vector_store %arg6[%c0_3, %c0_4], %2 {strides = array<i32>} : memref<304x32xf32, #tpu.memory_space<vmem>>, vector<24x32xf32>,
    %c280 = arith.constant 280 : index
    %c0_5 = arith.constant 0 : index
    %4 = vector.load %arg6[%c280, %c0_5] : memref<304x32xf32, #tpu.memory_space<vmem>>, vector<24x32xf32>
    tpu.vector_store %arg6[%c280, %c0_5], %2 {strides = array<i32>} : memref<304x32xf32, #tpu.memory_space<vmem>>, vector<24x32xf32>,
    %c0_6 = arith.constant 0 : index
    %c0_7 = arith.constant 0 : index
    %c0_8 = arith.constant 0 : index
    %5 = vector.load %arg2[%c0_6, %c0_7, %c0_8] : memref<1x336x32xf32, #tpu.memory_space<vmem>>, vector<1x256x32xf32>
    %6 = vector.shape_cast %5 : vector<1x256x32xf32> to vector<256x32xf32>
    %c24 = arith.constant 24 : index
    %c0_9 = arith.constant 0 : index
    %7 = vector.load %arg6[%c24, %c0_9] : memref<304x32xf32, #tpu.memory_space<vmem>>, vector<256x32xf32>
    tpu.vector_store %arg6[%c24, %c0_9], %6 {strides = array<i32>} : memref<304x32xf32, #tpu.memory_space<vmem>>, vector<256x32xf32>,
    %8 = tpu.iota {dimensions = array<i32: 0>} : vector<256x1xi32>
    %c16_i32 = arith.constant 16 : i32
    %c0_i32 = arith.constant 0 : i32
    %9 = arith.cmpi eq, %c16_i32, %c0_i32 : i32
    %c1_i32 = arith.constant 1 : i32
    %10 = arith.select %9, %c1_i32, %c16_i32 : i32
    %11 = vector.broadcast %10 : i32 to vector<256x1xi32>
    %12 = arith.remsi %8, %11 : vector<256x1xi32>
    %c0_i32_10 = arith.constant 0 : i32
    %13 = vector.broadcast %c0_i32_10 : i32 to vector<256x1xi32>
    %14 = arith.cmpi ne, %12, %13 : vector<256x1xi32>
    %c0_i32_11 = arith.constant 0 : i32
    %15 = vector.broadcast %c0_i32_11 : i32 to vector<256x1xi32>
    %16 = arith.cmpi slt, %12, %15 : vector<256x1xi32>
    %c0_i32_12 = arith.constant 0 : i32
    %17 = arith.cmpi slt, %10, %c0_i32_12 : i32
    %18 = vector.broadcast %17 : i1 to vector<256x1xi1>
    %19 = vector.broadcast %18 : vector<256x1xi1> to vector<256x1xi1>
    %20 = arith.xori %16, %19 : vector<256x1xi1>
    %21 = arith.andi %20, %14 : vector<256x1xi1>
    %22 = vector.broadcast %10 : i32 to vector<256x1xi32>
    %23 = arith.addi %12, %22 : vector<256x1xi32>
    %24 = arith.select %21, %23, %12 : vector<256x1xi1>, vector<256x1xi32>
    %c7 = arith.constant 7 : index
    %c0_13 = arith.constant 0 : index
    %25 = vector.load %arg6[%c7, %c0_13] : memref<304x32xf32, #tpu.memory_space<vmem>>, vector<256x32xf32>
    %26 = vector.extract_strided_slice %0 {offsets = [0, 0], sizes = [1, 32], strides = [1, 1]} : vector<9x32xf32> to vector<1x32xf32>
    %27 = vector.broadcast %26 : vector<1x32xf32> to vector<256x32xf32>
    %28 = arith.mulf %25, %27 : vector<256x32xf32>
    %c23 = arith.constant 23 : index
    %c0_14 = arith.constant 0 : index
    %29 = vector.load %arg6[%c23, %c0_14] : memref<304x32xf32, #tpu.memory_space<vmem>>, vector<256x32xf32>
    %30 = vector.extract_strided_slice %0 {offsets = [3, 0], sizes = [1, 32], strides = [1, 1]} : vector<9x32xf32> to vector<1x32xf32>
    %31 = vector.broadcast %30 : vector<1x32xf32> to vector<256x32xf32>
    %32 = arith.mulf %29, %31 : vector<256x32xf32>
    %33 = arith.addf %28, %32 : vector<256x32xf32>
    %c39 = arith.constant 39 : index
    %c0_15 = arith.constant 0 : index
    %34 = vector.load %arg6[%c39, %c0_15] : memref<304x32xf32, #tpu.memory_space<vmem>>, vector<256x32xf32>
    %35 = vector.extract_strided_slice %0 {offsets = [6, 0], sizes = [1, 32], strides = [1, 1]} : vector<9x32xf32> to vector<1x32xf32>
    %36 = vector.broadcast %35 : vector<1x32xf32> to vector<256x32xf32>
    %37 = arith.mulf %34, %36 : vector<256x32xf32>
    %38 = arith.addf %33, %37 : vector<256x32xf32>
    %c0_i32_16 = arith.constant 0 : i32
    %39 = vector.broadcast %c0_i32_16 : i32 to vector<256x1xi32>
    %40 = arith.cmpi eq, %24, %39 : vector<256x1xi32>
    %cst_17 = arith.constant 0.000000e+00 : f32
    %41 = vector.shape_cast %40 : vector<256x1xi1> to vector<256x1xi1>
    %42 = vector.broadcast %41 : vector<256x1xi1> to vector<256x32xi1>
    %43 = vector.broadcast %cst_17 : f32 to vector<256x32xf32>
    %44 = arith.select %42, %43, %38 : vector<256x32xi1>, vector<256x32xf32>
    %c8 = arith.constant 8 : index
    %c0_18 = arith.constant 0 : index
    %45 = vector.load %arg6[%c8, %c0_18] : memref<304x32xf32, #tpu.memory_space<vmem>>, vector<256x32xf32>
    %46 = vector.extract_strided_slice %0 {offsets = [1, 0], sizes = [1, 32], strides = [1, 1]} : vector<9x32xf32> to vector<1x32xf32>
    %47 = vector.broadcast %46 : vector<1x32xf32> to vector<256x32xf32>
    %48 = arith.mulf %45, %47 : vector<256x32xf32>
    %c24_19 = arith.constant 24 : index
    %c0_20 = arith.constant 0 : index
    %49 = vector.load %arg6[%c24_19, %c0_20] : memref<304x32xf32, #tpu.memory_space<vmem>>, vector<256x32xf32>
    %50 = vector.extract_strided_slice %0 {offsets = [4, 0], sizes = [1, 32], strides = [1, 1]} : vector<9x32xf32> to vector<1x32xf32>
    %51 = vector.broadcast %50 : vector<1x32xf32> to vector<256x32xf32>
    %52 = arith.mulf %49, %51 : vector<256x32xf32>
    %53 = arith.addf %48, %52 : vector<256x32xf32>
    %c40 = arith.constant 40 : index
    %c0_21 = arith.constant 0 : index
    %54 = vector.load %arg6[%c40, %c0_21] : memref<304x32xf32, #tpu.memory_space<vmem>>, vector<256x32xf32>
    %55 = vector.extract_strided_slice %0 {offsets = [7, 0], sizes = [1, 32], strides = [1, 1]} : vector<9x32xf32> to vector<1x32xf32>
    %56 = vector.broadcast %55 : vector<1x32xf32> to vector<256x32xf32>
    %57 = arith.mulf %54, %56 : vector<256x32xf32>
    %58 = arith.addf %53, %57 : vector<256x32xf32>
    %59 = arith.addf %44, %58 : vector<256x32xf32>
    %c9 = arith.constant 9 : index
    %c0_22 = arith.constant 0 : index
    %60 = vector.load %arg6[%c9, %c0_22] : memref<304x32xf32, #tpu.memory_space<vmem>>, vector<256x32xf32>
    %61 = vector.extract_strided_slice %0 {offsets = [2, 0], sizes = [1, 32], strides = [1, 1]} : vector<9x32xf32> to vector<1x32xf32>
    %62 = vector.broadcast %61 : vector<1x32xf32> to vector<256x32xf32>
    %63 = arith.mulf %60, %62 : vector<256x32xf32>
    %c25 = arith.constant 25 : index
    %c0_23 = arith.constant 0 : index
    %64 = vector.load %arg6[%c25, %c0_23] : memref<304x32xf32, #tpu.memory_space<vmem>>, vector<256x32xf32>
    %65 = vector.extract_strided_slice %0 {offsets = [5, 0], sizes = [1, 32], strides = [1, 1]} : vector<9x32xf32> to vector<1x32xf32>
    %66 = vector.broadcast %65 : vector<1x32xf32> to vector<256x32xf32>
    %67 = arith.mulf %64, %66 : vector<256x32xf32>
    %68 = arith.addf %63, %67 : vector<256x32xf32>
    %c41 = arith.constant 41 : index
    %c0_24 = arith.constant 0 : index
    %69 = vector.load %arg6[%c41, %c0_24] : memref<304x32xf32, #tpu.memory_space<vmem>>, vector<256x32xf32>
    %70 = vector.extract_strided_slice %0 {offsets = [8, 0], sizes = [1, 32], strides = [1, 1]} : vector<9x32xf32> to vector<1x32xf32>
    %71 = vector.broadcast %70 : vector<1x32xf32> to vector<256x32xf32>
    %72 = arith.mulf %69, %71 : vector<256x32xf32>
    %73 = arith.addf %68, %72 : vector<256x32xf32>
    %c15_i32 = arith.constant 15 : i32
    %74 = vector.broadcast %c15_i32 : i32 to vector<256x1xi32>
    %75 = arith.cmpi eq, %24, %74 : vector<256x1xi32>
    %cst_25 = arith.constant 0.000000e+00 : f32
    %76 = vector.shape_cast %75 : vector<256x1xi1> to vector<256x1xi1>
    %77 = vector.broadcast %76 : vector<256x1xi1> to vector<256x32xi1>
    %78 = vector.broadcast %cst_25 : f32 to vector<256x32xf32>
    %79 = arith.select %77, %78, %73 : vector<256x32xi1>, vector<256x32xf32>
    %80 = arith.addf %59, %79 : vector<256x32xf32>
    %81 = vector.broadcast %1 : vector<1x32xf32> to vector<256x32xf32>
    %82 = arith.addf %80, %81 : vector<256x32xf32>
    %c0_26 = arith.constant 0 : index
    %c0_27 = arith.constant 0 : index
    %c0_28 = arith.constant 0 : index
    %83 = vector.load %arg5[%c0_26, %c0_27, %c0_28] : memref<1x336x32xf32, #tpu.memory_space<vmem>>, vector<1x256x32xf32>
    %84 = vector.shape_cast %83 : vector<1x256x32xf32> to vector<256x32xf32>
    %85 = vector.shape_cast %82 : vector<256x32xf32> to vector<1x256x32xf32>
    tpu.vector_store %arg5[%c0_26, %c0_27, %c0_28], %85 {strides = array<i32>} : memref<1x336x32xf32, #tpu.memory_space<vmem>>, vector<1x256x32xf32>,
    %cst_29 = arith.constant 0.000000e+00 : f32
    %86 = vector.broadcast %cst_29 : f32 to vector<16x32xf32>
    %c0_30 = arith.constant 0 : index
    %c0_31 = arith.constant 0 : index
    %87 = vector.load %arg7[%c0_30, %c0_31] : memref<96x32xf32, #tpu.memory_space<vmem>>, vector<16x32xf32>
    tpu.vector_store %arg7[%c0_30, %c0_31], %86 {strides = array<i32>} : memref<96x32xf32, #tpu.memory_space<vmem>>, vector<16x32xf32>,
    %c80 = arith.constant 80 : index
    %c0_32 = arith.constant 0 : index
    %88 = vector.load %arg7[%c80, %c0_32] : memref<96x32xf32, #tpu.memory_space<vmem>>, vector<16x32xf32>
    tpu.vector_store %arg7[%c80, %c0_32], %86 {strides = array<i32>} : memref<96x32xf32, #tpu.memory_space<vmem>>, vector<16x32xf32>,
    %c0_33 = arith.constant 0 : index
    %c256 = arith.constant 256 : index
    %c0_34 = arith.constant 0 : index
    %89 = vector.load %arg2[%c0_33, %c256, %c0_34] : memref<1x336x32xf32, #tpu.memory_space<vmem>>, vector<1x64x32xf32>
    %90 = vector.shape_cast %89 : vector<1x64x32xf32> to vector<64x32xf32>
    %c16 = arith.constant 16 : index
    %c0_35 = arith.constant 0 : index
    %91 = vector.load %arg7[%c16, %c0_35] : memref<96x32xf32, #tpu.memory_space<vmem>>, vector<64x32xf32>
    tpu.vector_store %arg7[%c16, %c0_35], %90 {strides = array<i32>} : memref<96x32xf32, #tpu.memory_space<vmem>>, vector<64x32xf32>,
    %92 = tpu.iota {dimensions = array<i32: 0>} : vector<64x1xi32>
    %c8_i32 = arith.constant 8 : i32
    %c0_i32_36 = arith.constant 0 : i32
    %93 = arith.cmpi eq, %c8_i32, %c0_i32_36 : i32
    %c1_i32_37 = arith.constant 1 : i32
    %94 = arith.select %93, %c1_i32_37, %c8_i32 : i32
    %95 = vector.broadcast %94 : i32 to vector<64x1xi32>
    %96 = arith.remsi %92, %95 : vector<64x1xi32>
    %c0_i32_38 = arith.constant 0 : i32
    %97 = vector.broadcast %c0_i32_38 : i32 to vector<64x1xi32>
    %98 = arith.cmpi ne, %96, %97 : vector<64x1xi32>
    %c0_i32_39 = arith.constant 0 : i32
    %99 = vector.broadcast %c0_i32_39 : i32 to vector<64x1xi32>
    %100 = arith.cmpi slt, %96, %99 : vector<64x1xi32>
    %c0_i32_40 = arith.constant 0 : i32
    %101 = arith.cmpi slt, %94, %c0_i32_40 : i32
    %102 = vector.broadcast %101 : i1 to vector<64x1xi1>
    %103 = vector.broadcast %102 : vector<64x1xi1> to vector<64x1xi1>
    %104 = arith.xori %100, %103 : vector<64x1xi1>
    %105 = arith.andi %104, %98 : vector<64x1xi1>
    %106 = vector.broadcast %94 : i32 to vector<64x1xi32>
    %107 = arith.addi %96, %106 : vector<64x1xi32>
    %108 = arith.select %105, %107, %96 : vector<64x1xi1>, vector<64x1xi32>
    %c7_41 = arith.constant 7 : index
    %c0_42 = arith.constant 0 : index
    %109 = vector.load %arg7[%c7_41, %c0_42] : memref<96x32xf32, #tpu.memory_space<vmem>>, vector<64x32xf32>
    %110 = vector.extract_strided_slice %0 {offsets = [0, 0], sizes = [1, 32], strides = [1, 1]} : vector<9x32xf32> to vector<1x32xf32>
    %111 = vector.broadcast %110 : vector<1x32xf32> to vector<64x32xf32>
    %112 = arith.mulf %109, %111 : vector<64x32xf32>
    %c15 = arith.constant 15 : index
    %c0_43 = arith.constant 0 : index
    %113 = vector.load %arg7[%c15, %c0_43] : memref<96x32xf32, #tpu.memory_space<vmem>>, vector<64x32xf32>
    %114 = vector.extract_strided_slice %0 {offsets = [3, 0], sizes = [1, 32], strides = [1, 1]} : vector<9x32xf32> to vector<1x32xf32>
    %115 = vector.broadcast %114 : vector<1x32xf32> to vector<64x32xf32>
    %116 = arith.mulf %113, %115 : vector<64x32xf32>
    %117 = arith.addf %112, %116 : vector<64x32xf32>
    %c23_44 = arith.constant 23 : index
    %c0_45 = arith.constant 0 : index
    %118 = vector.load %arg7[%c23_44, %c0_45] : memref<96x32xf32, #tpu.memory_space<vmem>>, vector<64x32xf32>
    %119 = vector.extract_strided_slice %0 {offsets = [6, 0], sizes = [1, 32], strides = [1, 1]} : vector<9x32xf32> to vector<1x32xf32>
    %120 = vector.broadcast %119 : vector<1x32xf32> to vector<64x32xf32>
    %121 = arith.mulf %118, %120 : vector<64x32xf32>
    %122 = arith.addf %117, %121 : vector<64x32xf32>
    %c0_i32_46 = arith.constant 0 : i32
    %123 = vector.broadcast %c0_i32_46 : i32 to vector<64x1xi32>
    %124 = arith.cmpi eq, %108, %123 : vector<64x1xi32>
    %cst_47 = arith.constant 0.000000e+00 : f32
    %125 = vector.shape_cast %124 : vector<64x1xi1> to vector<64x1xi1>
    %126 = vector.broadcast %125 : vector<64x1xi1> to vector<64x32xi1>
    %127 = vector.broadcast %cst_47 : f32 to vector<64x32xf32>
    %128 = arith.select %126, %127, %122 : vector<64x32xi1>, vector<64x32xf32>
    %c8_48 = arith.constant 8 : index
    %c0_49 = arith.constant 0 : index
    %129 = vector.load %arg7[%c8_48, %c0_49] : memref<96x32xf32, #tpu.memory_space<vmem>>, vector<64x32xf32>
    %130 = vector.extract_strided_slice %0 {offsets = [1, 0], sizes = [1, 32], strides = [1, 1]} : vector<9x32xf32> to vector<1x32xf32>
    %131 = vector.broadcast %130 : vector<1x32xf32> to vector<64x32xf32>
    %132 = arith.mulf %129, %131 : vector<64x32xf32>
    %c16_50 = arith.constant 16 : index
    %c0_51 = arith.constant 0 : index
    %133 = vector.load %arg7[%c16_50, %c0_51] : memref<96x32xf32, #tpu.memory_space<vmem>>, vector<64x32xf32>
    %134 = vector.extract_strided_slice %0 {offsets = [4, 0], sizes = [1, 32], strides = [1, 1]} : vector<9x32xf32> to vector<1x32xf32>
    %135 = vector.broadcast %134 : vector<1x32xf32> to vector<64x32xf32>
    %136 = arith.mulf %133, %135 : vector<64x32xf32>
    %137 = arith.addf %132, %136 : vector<64x32xf32>
    %c24_52 = arith.constant 24 : index
    %c0_53 = arith.constant 0 : index
    %138 = vector.load %arg7[%c24_52, %c0_53] : memref<96x32xf32, #tpu.memory_space<vmem>>, vector<64x32xf32>
    %139 = vector.extract_strided_slice %0 {offsets = [7, 0], sizes = [1, 32], strides = [1, 1]} : vector<9x32xf32> to vector<1x32xf32>
    %140 = vector.broadcast %139 : vector<1x32xf32> to vector<64x32xf32>
    %141 = arith.mulf %138, %140 : vector<64x32xf32>
    %142 = arith.addf %137, %141 : vector<64x32xf32>
    %143 = arith.addf %128, %142 : vector<64x32xf32>
    %c9_54 = arith.constant 9 : index
    %c0_55 = arith.constant 0 : index
    %144 = vector.load %arg7[%c9_54, %c0_55] : memref<96x32xf32, #tpu.memory_space<vmem>>, vector<64x32xf32>
    %145 = vector.extract_strided_slice %0 {offsets = [2, 0], sizes = [1, 32], strides = [1, 1]} : vector<9x32xf32> to vector<1x32xf32>
    %146 = vector.broadcast %145 : vector<1x32xf32> to vector<64x32xf32>
    %147 = arith.mulf %144, %146 : vector<64x32xf32>
    %c17 = arith.constant 17 : index
    %c0_56 = arith.constant 0 : index
    %148 = vector.load %arg7[%c17, %c0_56] : memref<96x32xf32, #tpu.memory_space<vmem>>, vector<64x32xf32>
    %149 = vector.extract_strided_slice %0 {offsets = [5, 0], sizes = [1, 32], strides = [1, 1]} : vector<9x32xf32> to vector<1x32xf32>
    %150 = vector.broadcast %149 : vector<1x32xf32> to vector<64x32xf32>
    %151 = arith.mulf %148, %150 : vector<64x32xf32>
    %152 = arith.addf %147, %151 : vector<64x32xf32>
    %c25_57 = arith.constant 25 : index
    %c0_58 = arith.constant 0 : index
    %153 = vector.load %arg7[%c25_57, %c0_58] : memref<96x32xf32, #tpu.memory_space<vmem>>, vector<64x32xf32>
    %154 = vector.extract_strided_slice %0 {offsets = [8, 0], sizes = [1, 32], strides = [1, 1]} : vector<9x32xf32> to vector<1x32xf32>
    %155 = vector.broadcast %154 : vector<1x32xf32> to vector<64x32xf32>
    %156 = arith.mulf %153, %155 : vector<64x32xf32>
    %157 = arith.addf %152, %156 : vector<64x32xf32>
    %c7_i32 = arith.constant 7 : i32
    %158 = vector.broadcast %c7_i32 : i32 to vector<64x1xi32>
    %159 = arith.cmpi eq, %108, %158 : vector<64x1xi32>
    %cst_59 = arith.constant 0.000000e+00 : f32
    %160 = vector.shape_cast %159 : vector<64x1xi1> to vector<64x1xi1>
    %161 = vector.broadcast %160 : vector<64x1xi1> to vector<64x32xi1>
    %162 = vector.broadcast %cst_59 : f32 to vector<64x32xf32>
    %163 = arith.select %161, %162, %157 : vector<64x32xi1>, vector<64x32xf32>
    %164 = arith.addf %143, %163 : vector<64x32xf32>
    %165 = vector.broadcast %1 : vector<1x32xf32> to vector<64x32xf32>
    %166 = arith.addf %164, %165 : vector<64x32xf32>
    %c0_60 = arith.constant 0 : index
    %c256_61 = arith.constant 256 : index
    %c0_62 = arith.constant 0 : index
    %167 = vector.load %arg5[%c0_60, %c256_61, %c0_62] : memref<1x336x32xf32, #tpu.memory_space<vmem>>, vector<1x64x32xf32>
    %168 = vector.shape_cast %167 : vector<1x64x32xf32> to vector<64x32xf32>
    %169 = vector.shape_cast %166 : vector<64x32xf32> to vector<1x64x32xf32>
    tpu.vector_store %arg5[%c0_60, %c256_61, %c0_62], %169 {strides = array<i32>} : memref<1x336x32xf32, #tpu.memory_space<vmem>>, vector<1x64x32xf32>,
    %cst_63 = arith.constant 0.000000e+00 : f32
    %170 = vector.broadcast %cst_63 : f32 to vector<8x32xf32>
    %c0_64 = arith.constant 0 : index
    %c0_65 = arith.constant 0 : index
    %171 = vector.load %arg8[%c0_64, %c0_65] : memref<32x32xf32, #tpu.memory_space<vmem>>, vector<8x32xf32>
    tpu.vector_store %arg8[%c0_64, %c0_65], %170 {strides = array<i32>} : memref<32x32xf32, #tpu.memory_space<vmem>>, vector<8x32xf32>,
    %c24_66 = arith.constant 24 : index
    %c0_67 = arith.constant 0 : index
    %172 = vector.load %arg8[%c24_66, %c0_67] : memref<32x32xf32, #tpu.memory_space<vmem>>, vector<8x32xf32>
    tpu.vector_store %arg8[%c24_66, %c0_67], %170 {strides = array<i32>} : memref<32x32xf32, #tpu.memory_space<vmem>>, vector<8x32xf32>,
    %c0_68 = arith.constant 0 : index
    %c320 = arith.constant 320 : index
    %c0_69 = arith.constant 0 : index
    %173 = vector.load %arg2[%c0_68, %c320, %c0_69] : memref<1x336x32xf32, #tpu.memory_space<vmem>>, vector<1x16x32xf32>
    %174 = vector.shape_cast %173 : vector<1x16x32xf32> to vector<16x32xf32>
    %c8_70 = arith.constant 8 : index
    %c0_71 = arith.constant 0 : index
    %175 = vector.load %arg8[%c8_70, %c0_71] : memref<32x32xf32, #tpu.memory_space<vmem>>, vector<16x32xf32>
    tpu.vector_store %arg8[%c8_70, %c0_71], %174 {strides = array<i32>} : memref<32x32xf32, #tpu.memory_space<vmem>>, vector<16x32xf32>,
    %176 = tpu.iota {dimensions = array<i32: 0>} : vector<16x1xi32>
    %c4_i32 = arith.constant 4 : i32
    %c0_i32_72 = arith.constant 0 : i32
    %177 = arith.cmpi eq, %c4_i32, %c0_i32_72 : i32
    %c1_i32_73 = arith.constant 1 : i32
    %178 = arith.select %177, %c1_i32_73, %c4_i32 : i32
    %179 = vector.broadcast %178 : i32 to vector<16x1xi32>
    %180 = arith.remsi %176, %179 : vector<16x1xi32>
    %c0_i32_74 = arith.constant 0 : i32
    %181 = vector.broadcast %c0_i32_74 : i32 to vector<16x1xi32>
    %182 = arith.cmpi ne, %180, %181 : vector<16x1xi32>
    %c0_i32_75 = arith.constant 0 : i32
    %183 = vector.broadcast %c0_i32_75 : i32 to vector<16x1xi32>
    %184 = arith.cmpi slt, %180, %183 : vector<16x1xi32>
    %c0_i32_76 = arith.constant 0 : i32
    %185 = arith.cmpi slt, %178, %c0_i32_76 : i32
    %186 = vector.broadcast %185 : i1 to vector<16x1xi1>
    %187 = vector.broadcast %186 : vector<16x1xi1> to vector<16x1xi1>
    %188 = arith.xori %184, %187 : vector<16x1xi1>
    %189 = arith.andi %188, %182 : vector<16x1xi1>
    %190 = vector.broadcast %178 : i32 to vector<16x1xi32>
    %191 = arith.addi %180, %190 : vector<16x1xi32>
    %192 = arith.select %189, %191, %180 : vector<16x1xi1>, vector<16x1xi32>
    %c3 = arith.constant 3 : index
    %c0_77 = arith.constant 0 : index
    %193 = vector.load %arg8[%c3, %c0_77] : memref<32x32xf32, #tpu.memory_space<vmem>>, vector<16x32xf32>
    %194 = vector.extract_strided_slice %0 {offsets = [0, 0], sizes = [1, 32], strides = [1, 1]} : vector<9x32xf32> to vector<1x32xf32>
    %195 = vector.broadcast %194 : vector<1x32xf32> to vector<16x32xf32>
    %196 = arith.mulf %193, %195 : vector<16x32xf32>
    %c7_78 = arith.constant 7 : index
    %c0_79 = arith.constant 0 : index
    %197 = vector.load %arg8[%c7_78, %c0_79] : memref<32x32xf32, #tpu.memory_space<vmem>>, vector<16x32xf32>
    %198 = vector.extract_strided_slice %0 {offsets = [3, 0], sizes = [1, 32], strides = [1, 1]} : vector<9x32xf32> to vector<1x32xf32>
    %199 = vector.broadcast %198 : vector<1x32xf32> to vector<16x32xf32>
    %200 = arith.mulf %197, %199 : vector<16x32xf32>
    %201 = arith.addf %196, %200 : vector<16x32xf32>
    %c11 = arith.constant 11 : index
    %c0_80 = arith.constant 0 : index
    %202 = vector.load %arg8[%c11, %c0_80] : memref<32x32xf32, #tpu.memory_space<vmem>>, vector<16x32xf32>
    %203 = vector.extract_strided_slice %0 {offsets = [6, 0], sizes = [1, 32], strides = [1, 1]} : vector<9x32xf32> to vector<1x32xf32>
    %204 = vector.broadcast %203 : vector<1x32xf32> to vector<16x32xf32>
    %205 = arith.mulf %202, %204 : vector<16x32xf32>
    %206 = arith.addf %201, %205 : vector<16x32xf32>
    %c0_i32_81 = arith.constant 0 : i32
    %207 = vector.broadcast %c0_i32_81 : i32 to vector<16x1xi32>
    %208 = arith.cmpi eq, %192, %207 : vector<16x1xi32>
    %cst_82 = arith.constant 0.000000e+00 : f32
    %209 = vector.shape_cast %208 : vector<16x1xi1> to vector<16x1xi1>
    %210 = vector.broadcast %209 : vector<16x1xi1> to vector<16x32xi1>
    %211 = vector.broadcast %cst_82 : f32 to vector<16x32xf32>
    %212 = arith.select %210, %211, %206 : vector<16x32xi1>, vector<16x32xf32>
    %c4 = arith.constant 4 : index
    %c0_83 = arith.constant 0 : index
    %213 = vector.load %arg8[%c4, %c0_83] : memref<32x32xf32, #tpu.memory_space<vmem>>, vector<16x32xf32>
    %214 = vector.extract_strided_slice %0 {offsets = [1, 0], sizes = [1, 32], strides = [1, 1]} : vector<9x32xf32> to vector<1x32xf32>
    %215 = vector.broadcast %214 : vector<1x32xf32> to vector<16x32xf32>
    %216 = arith.mulf %213, %215 : vector<16x32xf32>
    %c8_84 = arith.constant 8 : index
    %c0_85 = arith.constant 0 : index
    %217 = vector.load %arg8[%c8_84, %c0_85] : memref<32x32xf32, #tpu.memory_space<vmem>>, vector<16x32xf32>
    %218 = vector.extract_strided_slice %0 {offsets = [4, 0], sizes = [1, 32], strides = [1, 1]} : vector<9x32xf32> to vector<1x32xf32>
    %219 = vector.broadcast %218 : vector<1x32xf32> to vector<16x32xf32>
    %220 = arith.mulf %217, %219 : vector<16x32xf32>
    %221 = arith.addf %216, %220 : vector<16x32xf32>
    %c12 = arith.constant 12 : index
    %c0_86 = arith.constant 0 : index
    %222 = vector.load %arg8[%c12, %c0_86] : memref<32x32xf32, #tpu.memory_space<vmem>>, vector<16x32xf32>
    %223 = vector.extract_strided_slice %0 {offsets = [7, 0], sizes = [1, 32], strides = [1, 1]} : vector<9x32xf32> to vector<1x32xf32>
    %224 = vector.broadcast %223 : vector<1x32xf32> to vector<16x32xf32>
    %225 = arith.mulf %222, %224 : vector<16x32xf32>
    %226 = arith.addf %221, %225 : vector<16x32xf32>
    %227 = arith.addf %212, %226 : vector<16x32xf32>
    %c5 = arith.constant 5 : index
    %c0_87 = arith.constant 0 : index
    %228 = vector.load %arg8[%c5, %c0_87] : memref<32x32xf32, #tpu.memory_space<vmem>>, vector<16x32xf32>
    %229 = vector.extract_strided_slice %0 {offsets = [2, 0], sizes = [1, 32], strides = [1, 1]} : vector<9x32xf32> to vector<1x32xf32>
    %230 = vector.broadcast %229 : vector<1x32xf32> to vector<16x32xf32>
    %231 = arith.mulf %228, %230 : vector<16x32xf32>
    %c9_88 = arith.constant 9 : index
    %c0_89 = arith.constant 0 : index
    %232 = vector.load %arg8[%c9_88, %c0_89] : memref<32x32xf32, #tpu.memory_space<vmem>>, vector<16x32xf32>
    %233 = vector.extract_strided_slice %0 {offsets = [5, 0], sizes = [1, 32], strides = [1, 1]} : vector<9x32xf32> to vector<1x32xf32>
    %234 = vector.broadcast %233 : vector<1x32xf32> to vector<16x32xf32>
    %235 = arith.mulf %232, %234 : vector<16x32xf32>
    %236 = arith.addf %231, %235 : vector<16x32xf32>
    %c13 = arith.constant 13 : index
    %c0_90 = arith.constant 0 : index
    %237 = vector.load %arg8[%c13, %c0_90] : memref<32x32xf32, #tpu.memory_space<vmem>>, vector<16x32xf32>
    %238 = vector.extract_strided_slice %0 {offsets = [8, 0], sizes = [1, 32], strides = [1, 1]} : vector<9x32xf32> to vector<1x32xf32>
    %239 = vector.broadcast %238 : vector<1x32xf32> to vector<16x32xf32>
    %240 = arith.mulf %237, %239 : vector<16x32xf32>
    %241 = arith.addf %236, %240 : vector<16x32xf32>
    %c3_i32 = arith.constant 3 : i32
    %242 = vector.broadcast %c3_i32 : i32 to vector<16x1xi32>
    %243 = arith.cmpi eq, %192, %242 : vector<16x1xi32>
    %cst_91 = arith.constant 0.000000e+00 : f32
    %244 = vector.shape_cast %243 : vector<16x1xi1> to vector<16x1xi1>
    %245 = vector.broadcast %244 : vector<16x1xi1> to vector<16x32xi1>
    %246 = vector.broadcast %cst_91 : f32 to vector<16x32xf32>
    %247 = arith.select %245, %246, %241 : vector<16x32xi1>, vector<16x32xf32>
    %248 = arith.addf %227, %247 : vector<16x32xf32>
    %249 = vector.broadcast %1 : vector<1x32xf32> to vector<16x32xf32>
    %250 = arith.addf %248, %249 : vector<16x32xf32>
    %c0_92 = arith.constant 0 : index
    %c320_93 = arith.constant 320 : index
    %c0_94 = arith.constant 0 : index
    %251 = vector.load %arg5[%c0_92, %c320_93, %c0_94] : memref<1x336x32xf32, #tpu.memory_space<vmem>>, vector<1x16x32xf32>
    %252 = vector.shape_cast %251 : vector<1x16x32xf32> to vector<16x32xf32>
    %253 = vector.shape_cast %250 : vector<16x32xf32> to vector<1x16x32xf32>
    tpu.vector_store %arg5[%c0_92, %c320_93, %c0_94], %253 {strides = array<i32>} : memref<1x336x32xf32, #tpu.memory_space<vmem>>, vector<1x16x32xf32>,
    return
  }
  func.func @transform_0(%arg0: i32, %arg1: i32) -> (i32, i32, i32) {
    %c0_i32 = arith.constant 0 : i32
    %c0_i32_0 = arith.constant 0 : i32
    return %arg0, %c0_i32, %arg1 : i32, i32, i32
  }
  func.func @transform_1(%arg0: i32, %arg1: i32) -> (i32, i32) {
    %c0_i32 = arith.constant 0 : i32
    %c0_i32_0 = arith.constant 0 : i32
    return %c0_i32, %arg1 : i32, i32
  }
  func.func @transform_2(%arg0: i32, %arg1: i32) -> (i32, i32) {
    %c0_i32 = arith.constant 0 : i32
    %c0_i32_0 = arith.constant 0 : i32
    return %c0_i32, %arg1 : i32, i32
  }
  func.func @transform_3(%arg0: i32, %arg1: i32) -> (i32, i32, i32) {
    %c0_i32 = arith.constant 0 : i32
    %c0_i32_0 = arith.constant 0 : i32
    return %arg0, %c0_i32, %arg1 : i32, i32, i32
  }
}

</mosaic_0001>

<llo_original>
// kernel: dwconv_forward.1
$region0: #{dwconv_forward.1}
  #allocation0 [shape = 'u32[]', space=smem, size = 0x4, offset = 0x4, fixed_abs, tag = 'smem constant byte address 0x4 - core index']
  #allocation1 [shape = 'u32[144,128]{1,0:T(1,128)}', space=vmem, size = 0x12000, scoped, tag = 'internal scratch']
  #allocation2 [shape = 'f32[304,32]{1,0:T(8,128)}', space=vmem, size = 0x26000, scoped, tag = 'scratch operand']
  #allocation3 [shape = 'f32[96,32]{1,0:T(8,128)}', space=vmem, size = 0xc000, scoped, tag = 'scratch operand']
  #allocation4 [shape = 'f32[32,32]{1,0:T(8,128)}', space=vmem, size = 0x4000, scoped, tag = 'scratch operand']
  %s0 = inlined_call_operand.vmem [shape: f32[2,336,32], index: 0, kind: input, shape index: {}]
  %s1 = inlined_call_operand.vmem [shape: f32[9,32], index: 1, kind: input, shape index: {}]
  %s2 = inlined_call_operand.vmem [shape: f32[1,32], index: 2, kind: input, shape index: {}]
  %s3 = inlined_call_operand.vmem [shape: f32[2,336,32], index: 3, kind: output, shape index: {}]
  %s4 = sld [smem:[#allocation0]]
  $region45: #{dwconv_forward.1} parent=0
    _
  %s6 = ssub.s32 1, %s4
  %s7 = scalar_select 0, %s6, %s4
  loop: start=0, step=1, limit=4
  $region2: #{dwconv_forward.1} parent=0 // loop_pre_header
    _
  $region3: #{dwconv_forward.1} parent=0 // loop_header
    %s9 = sphi 0, %s13
    %p10 = scmp.ge.s32.totalorder %s9, 4
    %s16 = sphi 0, %s28
    %s17 = sphi 0, %s24
    %s18 = sphi 0, %s16
    %s19 = sphi 0, %s17
    %s20 = sphi 0, %s18
    %s21 = sphi 0, %s19
    %s33 = sphi 0, %s35
    %s36 = sphi 0, %s33
    %s37 = sphi 0, %s36
    %s53 = sphi 0, %s37
    %s59 = sphi 0, %s61
    %s62 = sphi 0, %s59
    %s63 = sphi 0, %s62
    %s79 = sphi 0, %s63
    %s85 = sphi 0, %s87
    %s88 = sphi 0, %s85
    %s89 = sphi 0, %s88
    %s105 = sphi 0, %s89
    %s113 = sphi 0, %s115
    %s116 = sphi 0, %s113
    %s117 = sphi 0, %s116
    %s133 = sphi 0, %s117
  $region4: #{dwconv_forward.1} parent=0 // loop_header_branch
    %12 = sbr.rel (%p10) target = $region8
  $region5: #{dwconv_forward.1} parent=0 // loop_body
    %s14 = ssub.s32 %s9, 1
    %s15 = ssub.s32 %s9, 2
    %s22 = sadd.s32 1, %s17
    %p23 = scmp.ge.s32.totalorder %s22, 1
    %s24 = scalar_select %p23, 0, %s22
    %s25 = sadd.s32 1, %s16
    %s26 = scalar_select %p23, %s25, %s16
    %p27 = scmp.ge.s32.totalorder %s26, 2
    %s28 = scalar_select %p27, 0, %s26
    %s29 = ssub.s32 %s16, %s28
    %s30 = ssub.s32 %s17, %s24
    %s31 = sor.u32 %s29, %s30
    %p32 = scmp.eq.s32.totalorder %s31, 0
    %s34 = sadd.s32 %s33, 1
    %s35 = scalar_select %p32, %s33, %s34
    %p38 = pneg %p32
    %p39 = scmp.eq.s32.totalorder %s9, 1
    %p40 = por %p38, %p39
    %p41 = scmp.ne.s32.totalorder %s33, %s36
    %p42 = scmp.eq.s32.totalorder %s9, 0
    %p43 = por %p41, %p42
    %p44 = scmp.ne.s32.totalorder %s33, %s36
    %p45 = scmp.eq.s32.totalorder %s14, 1
    %p46 = por %p44, %p45
    %p47 = scmp.ne.s32.totalorder %s36, %s37
    %p48 = scmp.eq.s32.totalorder %s14, 0
    %p49 = por %p47, %p48
    %p50 = scmp.ne.s32.totalorder %s36, %s37
    %p51 = scmp.eq.s32.totalorder %s15, 1
    %p52 = por %p50, %p51
    %p54 = scmp.ne.s32.totalorder %s37, %s53
    %p55 = scmp.eq.s32.totalorder %s15, 0
    %p56 = por %p54, %p55
    %s57 = ssub.s32 %s17, %s24
    %p58 = scmp.eq.s32.totalorder %s57, 0
    %s60 = sadd.s32 %s59, 1
    %s61 = scalar_select %p58, %s59, %s60
    %p64 = pneg %p58
    %p65 = scmp.eq.s32.totalorder %s9, 1
    %p66 = por %p64, %p65
    %p67 = scmp.ne.s32.totalorder %s59, %s62
    %p68 = scmp.eq.s32.totalorder %s9, 0
    %p69 = por %p67, %p68
    %p70 = scmp.ne.s32.totalorder %s59, %s62
    %p71 = scmp.eq.s32.totalorder %s14, 1
    %p72 = por %p70, %p71
    %p73 = scmp.ne.s32.totalorder %s62, %s63
    %p74 = scmp.eq.s32.totalorder %s14, 0
    %p75 = por %p73, %p74
    %p76 = scmp.ne.s32.totalorder %s62, %s63
    %p77 = scmp.eq.s32.totalorder %s15, 1
    %p78 = por %p76, %p77
    %p80 = scmp.ne.s32.totalorder %s63, %s79
    %p81 = scmp.eq.s32.totalorder %s15, 0
    %p82 = por %p80, %p81
    %s83 = ssub.s32 %s17, %s24
    %p84 = scmp.eq.s32.totalorder %s83, 0
    %s86 = sadd.s32 %s85, 1
    %s87 = scalar_select %p84, %s85, %s86
    %p90 = pneg %p84
    %p91 = scmp.eq.s32.totalorder %s9, 1
    %p92 = por %p90, %p91
    %p93 = scmp.ne.s32.totalorder %s85, %s88
    %p94 = scmp.eq.s32.totalorder %s9, 0
    %p95 = por %p93, %p94
    %p96 = scmp.ne.s32.totalorder %s85, %s88
    %p97 = scmp.eq.s32.totalorder %s14, 1
    %p98 = por %p96, %p97
    %p99 = scmp.ne.s32.totalorder %s88, %s89
    %p100 = scmp.eq.s32.totalorder %s14, 0
    %p101 = por %p99, %p100
    %p102 = scmp.ne.s32.totalorder %s88, %s89
    %p103 = scmp.eq.s32.totalorder %s15, 1
    %p104 = por %p102, %p103
    %p106 = scmp.ne.s32.totalorder %s89, %s105
    %p107 = scmp.eq.s32.totalorder %s15, 0
    %p108 = por %p106, %p107
    %s109 = ssub.s32 %s16, %s28
    %s110 = ssub.s32 %s17, %s24
    %s111 = sor.u32 %s109, %s110
    %p112 = scmp.eq.s32.totalorder %s111, 0
    %s114 = sadd.s32 %s113, 1
    %s115 = scalar_select %p112, %s113, %s114
    %p118 = pneg %p112
    %p119 = scmp.eq.s32.totalorder %s9, 1
    %p120 = por %p118, %p119
    %p121 = scmp.ne.s32.totalorder %s113, %s116
    %p122 = scmp.eq.s32.totalorder %s9, 0
    %p123 = por %p121, %p122
    %p124 = scmp.ne.s32.totalorder %s113, %s116
    %p125 = scmp.eq.s32.totalorder %s14, 1
    %p126 = por %p124, %p125
    %p127 = scmp.ne.s32.totalorder %s116, %s117
    %p128 = scmp.eq.s32.totalorder %s14, 0
    %p129 = por %p127, %p128
    %p130 = scmp.ne.s32.totalorder %s116, %s117
    %p131 = scmp.eq.s32.totalorder %s15, 1
    %p132 = por %p130, %p131
    %p134 = scmp.ne.s32.totalorder %s117, %s133
    %p135 = scmp.eq.s32.totalorder %s15, 0
    %p136 = por %p134, %p135
    %p137 = scmp.le.s32.totalorder 1, %s9
    %p138 = scmp.lt.s32.totalorder %s9, 3
    %p139 = pnand %p137, %p138
    %p140 = pneg %p139
    // Predicated region
    $region9: #{dwconv_forward.1} parent=5 // pred_check
      _
    $region10: #{dwconv_forward.1} parent=5 // pred_check_branch
      %142 = sbr.rel (%p139) target = $region12
    $region11: #{dwconv_forward.1} parent=5 // pred_region
      %s143 = ssub.s32 %s9, 1
      // Predicated region
      $region13: #{dwconv_forward.1} parent=11 // pred_check
        %p144 = pneg %p75
      $region14: #{dwconv_forward.1} parent=11 // pred_check_branch
        %146 = sbr.rel (%p144) target = $region16
      $region15: #{dwconv_forward.1} parent=11 // pred_region
        %p147 = scmp.lt.s32.totalorder %s19, 0
        %s148 = scalar_select %p147, %s19, 0
        %s149 = smul.addr %s148, 8
        %s150 = scalar_lea.vmem %s1, %s149
      $region16: #{dwconv_forward.1} parent=11 // pred_fallthru
        _
      // Predicated region
      $region17: #{dwconv_forward.1} parent=11 // pred_check
        %p151 = pneg %p101
      $region18: #{dwconv_forward.1} parent=11 // pred_check_branch
        %153 = sbr.rel (%p151) target = $region20
      $region19: #{dwconv_forward.1} parent=11 // pred_region
        %p154 = scmp.lt.s32.totalorder %s19, 0
        %s155 = scalar_select %p154, %s19, 0
        %s156 = scalar_lea.vmem %s2, %s155
      $region20: #{dwconv_forward.1} parent=11 // pred_fallthru
        _
    $region12: #{dwconv_forward.1} parent=5 // pred_fallthru
      _
    %p157 = scmp.lt.s32.totalorder %s9, 2
    // Predicated region
    $region21: #{dwconv_forward.1} parent=5 // pred_check
      %p158 = pneg %p157
    $region22: #{dwconv_forward.1} parent=5 // pred_check_branch
      %160 = sbr.rel (%p158) target = $region24
    $region23: #{dwconv_forward.1} parent=5 // pred_region
      // Predicated region
      $region25: #{dwconv_forward.1} parent=23 // pred_check
        %p161 = pneg %p43
      $region26: #{dwconv_forward.1} parent=23 // pred_check_branch
        %163 = sbr.rel (%p161) target = $region28
      $region27: #{dwconv_forward.1} parent=23 // pred_region
        %p164 = scmp.lt.s32.totalorder %s16, 1
        %s165 = scalar_select %p164, %s16, 1
        %p166 = scmp.lt.s32.totalorder %s17, 0
        %s167 = scalar_select %p166, %s17, 0
        %s168 = smul.addr %s165, 42
        %s169 = sadd.s32 %s167, %s168
        %s170 = smul.addr %s169, 8
        %s171 = scalar_lea.vmem %s0, %s170
      $region28: #{dwconv_forward.1} parent=23 // pred_fallthru
        _
    $region24: #{dwconv_forward.1} parent=5 // pred_fallthru
      _
    %p172 = scmp.le.s32.totalorder 1, %s9
    %p173 = scmp.lt.s32.totalorder %s9, 3
    %p174 = pnand %p172, %p173
    %p175 = pneg %p174
    // Predicated region
    $region29: #{dwconv_forward.1} parent=5 // pred_check
      _
    $region30: #{dwconv_forward.1} parent=5 // pred_check_branch
      %177 = sbr.rel (%p174) target = $region32
    $region31: #{dwconv_forward.1} parent=5 // pred_region
      %s178 = ssub.s32 %s9, 1
      %p179 = scmp.lt.s32.totalorder %s18, 1
      %s180 = scalar_select %p179, %s18, 1
      %p181 = scmp.lt.s32.totalorder %s19, 0
      %s182 = scalar_select %p181, %s19, 0
      %s183 = smul.addr %s180, 42
      %s184 = sadd.s32 %s182, %s183
      %s185 = smul.addr %s184, 8
      %s186 = scalar_lea.vmem %s0, %s185
      %p187 = pneg %p49
      %p188 = pneg %p46
      %p189 = scmp.lt.s32.totalorder %s19, 0
      %s190 = scalar_select %p189, %s19, 0
      %s191 = smul.addr %s190, 8
      %s192 = scalar_lea.vmem %s1, %s191
      %p193 = pneg %p75
      %p194 = pneg %p72
      %p195 = scmp.lt.s32.totalorder %s19, 0
      %s196 = scalar_select %p195, %s19, 0
      %s197 = scalar_lea.vmem %s2, %s196
      %p198 = pneg %p101
      %p199 = pneg %p98
      %p200 = pneg %p129
      %p201 = pneg %p126
      %p202 = scmp.lt.s32.totalorder %s18, 1
      %s203 = scalar_select %p202, %s18, 1
      %p204 = scmp.lt.s32.totalorder %s19, 0
      %s205 = scalar_select %p204, %s19, 0
      %s206 = smul.addr %s203, 42
      %s207 = sadd.s32 %s205, %s206
      %s208 = smul.addr %s207, 8
      %s209 = scalar_lea.vmem %s3, %s208
      %p210 = scmp.lt.s32.totalorder %s18, 1
      %s211 = scalar_select %p210, %s18, 1
      %p212 = scmp.lt.s32.totalorder %s19, 0
      %s213 = scalar_select %p212, %s19, 0
      %s214 = smul.addr %s211, 42
      %s215 = sadd.s32 %s213, %s214
      %s216 = smul.addr %s215, 8
      %s217 = scalar_lea.vmem %s0, %s216
      %p218 = scmp.lt.s32.totalorder %s19, 0
      %s219 = scalar_select %p218, %s19, 0
      %s220 = smul.addr %s219, 8
      %s221 = scalar_lea.vmem %s1, %s220
      %p222 = scmp.lt.s32.totalorder %s19, 0
      %s223 = scalar_select %p222, %s19, 0
      %s224 = scalar_lea.vmem %s2, %s223
      %p225 = scmp.lt.s32.totalorder %s18, 1
      %s226 = scalar_select %p225, %s18, 1
      %p227 = scmp.lt.s32.totalorder %s19, 0
      %s228 = scalar_select %p227, %s19, 0
      %s229 = smul.addr %s226, 42
      %s230 = sadd.s32 %s228, %s229
      %s231 = smul.addr %s230, 8
      %s232 = scalar_lea.vmem %s3, %s231
      %v233 = vld [vmem:[%s221] sm:$0xff]
      %v234 = vld [vmem:[%s221 + $0x8] sm:$0x1]
      %v235 = vld [vmem:[%s224] sm:$0x1]
      %vm236 = vcmask 261120
      %237 = vst.msk [vmem:[#allocation2] sm:$0xff] %vm236, 0.0
      %238 = vst.msk [vmem:[#allocation2 + $0x8] sm:$0xff] %vm236, 0.0
      %239 = vst.msk [vmem:[#allocation2 + $0x10] sm:$0xff] %vm236, 0.0
      %240 = vst.msk [vmem:[#allocation2 + $0x118] sm:$0xff] %vm236, 0.0
      %241 = vst.msk [vmem:[#allocation2 + $0x120] sm:$0xff] %vm236, 0.0
      %242 = vst.msk [vmem:[#allocation2 + $0x128] sm:$0xff] %vm236, 0.0
      %v243 = vld [vmem:[%s217] sm:$0xff]
      %v244 = vld [vmem:[%s217 + $0x8] sm:$0xff]
      %v245 = vld [vmem:[%s217 + $0x10] sm:$0xff]
      %v246 = vld [vmem:[%s217 + $0x18] sm:$0xff]
      %v247 = vld [vmem:[%s217 + $0x20] sm:$0xff]
      %v248 = vld [vmem:[%s217 + $0x28] sm:$0xff]
      %v249 = vld [vmem:[%s217 + $0x30] sm:$0xff]
      %v250 = vld [vmem:[%s217 + $0x38] sm:$0xff]
      %v251 = vld [vmem:[%s217 + $0x40] sm:$0xff]
      %v252 = vld [vmem:[%s217 + $0x48] sm:$0xff]
      %v253 = vld [vmem:[%s217 + $0x50] sm:$0xff]
      %v254 = vld [vmem:[%s217 + $0x58] sm:$0xff]
      %v255 = vld [vmem:[%s217 + $0x60] sm:$0xff]
      %v256 = vld [vmem:[%s217 + $0x68] sm:$0xff]
      %v257 = vld [vmem:[%s217 + $0x70] sm:$0xff]
      %v258 = vld [vmem:[%s217 + $0x78] sm:$0xff]
      %v259 = vld [vmem:[%s217 + $0x80] sm:$0xff]
      %v260 = vld [vmem:[%s217 + $0x88] sm:$0xff]
      %v261 = vld [vmem:[%s217 + $0x90] sm:$0xff]
      %v262 = vld [vmem:[%s217 + $0x98] sm:$0xff]
      %v263 = vld [vmem:[%s217 + $0xa0] sm:$0xff]
      %v264 = vld [vmem:[%s217 + $0xa8] sm:$0xff]
      %v265 = vld [vmem:[%s217 + $0xb0] sm:$0xff]
      %v266 = vld [vmem:[%s217 + $0xb8] sm:$0xff]
      %v267 = vld [vmem:[%s217 + $0xc0] sm:$0xff]
      %v268 = vld [vmem:[%s217 + $0xc8] sm:$0xff]
      %v269 = vld [vmem:[%s217 + $0xd0] sm:$0xff]
      %v270 = vld [vmem:[%s217 + $0xd8] sm:$0xff]
      %v271 = vld [vmem:[%s217 + $0xe0] sm:$0xff]
      %v272 = vld [vmem:[%s217 + $0xe8] sm:$0xff]
      %v273 = vld [vmem:[%s217 + $0xf0] sm:$0xff]
      %v274 = vld [vmem:[%s217 + $0xf8] sm:$0xff]
      %275 = vst.msk [vmem:[#allocation2 + $0x18] sm:$0xff] %vm236, %v243
      %276 = vst.msk [vmem:[#allocation2 + $0x20] sm:$0xff] %vm236, %v244
      %277 = vst.msk [vmem:[#allocation2 + $0x28] sm:$0xff] %vm236, %v245
      %278 = vst.msk [vmem:[#allocation2 + $0x30] sm:$0xff] %vm236, %v246
      %279 = vst.msk [vmem:[#allocation2 + $0x38] sm:$0xff] %vm236, %v247
      %280 = vst.msk [vmem:[#allocation2 + $0x40] sm:$0xff] %vm236, %v248
      %281 = vst.msk [vmem:[#allocation2 + $0x48] sm:$0xff] %vm236, %v249
      %282 = vst.msk [vmem:[#allocation2 + $0x50] sm:$0xff] %vm236, %v250
      %283 = vst.msk [vmem:[#allocation2 + $0x58] sm:$0xff] %vm236, %v251
      %284 = vst.msk [vmem:[#allocation2 + $0x60] sm:$0xff] %vm236, %v252
      %285 = vst.msk [vmem:[#allocation2 + $0x68] sm:$0xff] %vm236, %v253
      %286 = vst.msk [vmem:[#allocation2 + $0x70] sm:$0xff] %vm236, %v254
      %287 = vst.msk [vmem:[#allocation2 + $0x78] sm:$0xff] %vm236, %v255
      %288 = vst.msk [vmem:[#allocation2 + $0x80] sm:$0xff] %vm236, %v256
      %289 = vst.msk [vmem:[#allocation2 + $0x88] sm:$0xff] %vm236, %v257
      %290 = vst.msk [vmem:[#allocation2 + $0x90] sm:$0xff] %vm236, %v258
      %291 = vst.msk [vmem:[#allocation2 + $0x98] sm:$0xff] %vm236, %v259
      %292 = vst.msk [vmem:[#allocation2 + $0xa0] sm:$0xff] %vm236, %v260
      %293 = vst.msk [vmem:[#allocation2 + $0xa8] sm:$0xff] %vm236, %v261
      %294 = vst.msk [vmem:[#allocation2 + $0xb0] sm:$0xff] %vm236, %v262
      %295 = vst.msk [vmem:[#allocation2 + $0xb8] sm:$0xff] %vm236, %v263
      %296 = vst.msk [vmem:[#allocation2 + $0xc0] sm:$0xff] %vm236, %v264
      %297 = vst.msk [vmem:[#allocation2 + $0xc8] sm:$0xff] %vm236, %v265
      %298 = vst.msk [vmem:[#allocation2 + $0xd0] sm:$0xff] %vm236, %v266
      %299 = vst.msk [vmem:[#allocation2 + $0xd8] sm:$0xff] %vm236, %v267
      %300 = vst.msk [vmem:[#allocation2 + $0xe0] sm:$0xff] %vm236, %v268
      %301 = vst.msk [vmem:[#allocation2 + $0xe8] sm:$0xff] %vm236, %v269
      %302 = vst.msk [vmem:[#allocation2 + $0xf0] sm:$0xff] %vm236, %v270
      %303 = vst.msk [vmem:[#allocation2 + $0xf8] sm:$0xff] %vm236, %v271
      %304 = vst.msk [vmem:[#allocation2 + $0x100] sm:$0xff] %vm236, %v272
      %305 = vst.msk [vmem:[#allocation2 + $0x108] sm:$0xff] %vm236, %v273
      %306 = vst.msk [vmem:[#allocation2 + $0x110] sm:$0xff] %vm236, %v274
      %v307 = vlaneseq
      %v308 = vshrl.u32 %v307, 7
      %v309 = vadd.s32 %v308, 8
      %v310 = vadd.s32 %v308, 16
      %v311 = vadd.s32 %v308, 24
      %v312 = vadd.s32 %v308, 32
      %v313 = vadd.s32 %v308, 40
      %v314 = vadd.s32 %v308, 48
      %v315 = vadd.s32 %v308, 56
      %v316 = vadd.s32 %v308, 64
      %v317 = vadd.s32 %v308, 72
      %v318 = vadd.s32 %v308, 80
      %v319 = vadd.s32 %v308, 88
      %v320 = vadd.s32 %v308, 96
      %v321 = vadd.s32 %v308, 104
      %v322 = vadd.s32 %v308, 112
      %v323 = vadd.s32 %v308, 120
      %v324 = vadd.s32 %v308, 128
      %v325 = vadd.s32 %v308, 136
      %v326 = vadd.s32 %v308, 144
      %v327 = vadd.s32 %v308, 152
      %v328 = vadd.s32 %v308, 160
      %v329 = vadd.s32 %v308, 168
      %v330 = vadd.s32 %v308, 176
      %v331 = vadd.s32 %v308, 184
      %v332 = vadd.s32 %v308, 192
      %v333 = vadd.s32 %v308, 200
      %v334 = vadd.s32 %v308, 208
      %v335 = vadd.s32 %v308, 216
      %v336 = vadd.s32 %v308, 224
      %v337 = vadd.s32 %v308, 232
      %v338 = vadd.s32 %v308, 240
      %v339 = vadd.s32 %v308, 248
      %vm340 = vcmp.lt.s32.totalorder %v308, 0
      %v341 = vsub.s32 0, %v308
      %v342 = vsel %vm340, %v341, %v308
      %v343 = vshrl.u32 %v342, 4
      %v344 = vand.u32 %v342, 15
      %v345 = vsub.s32 0, %v344
      %v346 = vsel %vm340, %v345, %v344
      %vm347 = vcmp.lt.s32.totalorder %v309, 0
      %v348 = vsub.s32 0, %v309
      %v349 = vsel %vm347, %v348, %v309
      %v350 = vshrl.u32 %v349, 4
      %v351 = vand.u32 %v349, 15
      %v352 = vsub.s32 0, %v351
      %v353 = vsel %vm347, %v352, %v351
      %vm354 = vcmp.lt.s32.totalorder %v310, 0
      %v355 = vsub.s32 0, %v310
      %v356 = vsel %vm354, %v355, %v310
      %v357 = vshrl.u32 %v356, 4
      %v358 = vand.u32 %v356, 15
      %v359 = vsub.s32 0, %v358
      %v360 = vsel %vm354, %v359, %v358
      %vm361 = vcmp.lt.s32.totalorder %v311, 0
      %v362 = vsub.s32 0, %v311
      %v363 = vsel %vm361, %v362, %v311
      %v364 = vshrl.u32 %v363, 4
      %v365 = vand.u32 %v363, 15
      %v366 = vsub.s32 0, %v365
      %v367 = vsel %vm361, %v366, %v365
      %vm368 = vcmp.lt.s32.totalorder %v312, 0
      %v369 = vsub.s32 0, %v312
      %v370 = vsel %vm368, %v369, %v312
      %v371 = vshrl.u32 %v370, 4
      %v372 = vand.u32 %v370, 15
      %v373 = vsub.s32 0, %v372
      %v374 = vsel %vm368, %v373, %v372
      %vm375 = vcmp.lt.s32.totalorder %v313, 0
      %v376 = vsub.s32 0, %v313
      %v377 = vsel %vm375, %v376, %v313
      %v378 = vshrl.u32 %v377, 4
      %v379 = vand.u32 %v377, 15
      %v380 = vsub.s32 0, %v379
      %v381 = vsel %vm375, %v380, %v379
      %vm382 = vcmp.lt.s32.totalorder %v314, 0
      %v383 = vsub.s32 0, %v314
      %v384 = vsel %vm382, %v383, %v314
      %v385 = vshrl.u32 %v384, 4
      %v386 = vand.u32 %v384, 15
      %v387 = vsub.s32 0, %v386
      %v388 = vsel %vm382, %v387, %v386
      %vm389 = vcmp.lt.s32.totalorder %v315, 0
      %v390 = vsub.s32 0, %v315
      %v391 = vsel %vm389, %v390, %v315
      %v392 = vshrl.u32 %v391, 4
      %v393 = vand.u32 %v391, 15
      %v394 = vsub.s32 0, %v393
      %v395 = vsel %vm389, %v394, %v393
      %vm396 = vcmp.lt.s32.totalorder %v316, 0
      %v397 = vsub.s32 0, %v316
      %v398 = vsel %vm396, %v397, %v316
      %v399 = vshrl.u32 %v398, 4
      %v400 = vand.u32 %v398, 15
      %v401 = vsub.s32 0, %v400
      %v402 = vsel %vm396, %v401, %v400
      %vm403 = vcmp.lt.s32.totalorder %v317, 0
      %v404 = vsub.s32 0, %v317
      %v405 = vsel %vm403, %v404, %v317
      %v406 = vshrl.u32 %v405, 4
      %v407 = vand.u32 %v405, 15
      %v408 = vsub.s32 0, %v407
      %v409 = vsel %vm403, %v408, %v407
      %vm410 = vcmp.lt.s32.totalorder %v318, 0
      %v411 = vsub.s32 0, %v318
      %v412 = vsel %vm410, %v411, %v318
      %v413 = vshrl.u32 %v412, 4
      %v414 = vand.u32 %v412, 15
      %v415 = vsub.s32 0, %v414
      %v416 = vsel %vm410, %v415, %v414
      %vm417 = vcmp.lt.s32.totalorder %v319, 0
      %v418 = vsub.s32 0, %v319
      %v419 = vsel %vm417, %v418, %v319
      %v420 = vshrl.u32 %v419, 4
      %v421 = vand.u32 %v419, 15
      %v422 = vsub.s32 0, %v421
      %v423 = vsel %vm417, %v422, %v421
      %vm424 = vcmp.lt.s32.totalorder %v320, 0
      %v425 = vsub.s32 0, %v320
      %v426 = vsel %vm424, %v425, %v320
      %v427 = vshrl.u32 %v426, 4
      %v428 = vand.u32 %v426, 15
      %v429 = vsub.s32 0, %v428
      %v430 = vsel %vm424, %v429, %v428
      %vm431 = vcmp.lt.s32.totalorder %v321, 0
      %v432 = vsub.s32 0, %v321
      %v433 = vsel %vm431, %v432, %v321
      %v434 = vshrl.u32 %v433, 4
      %v435 = vand.u32 %v433, 15
      %v436 = vsub.s32 0, %v435
      %v437 = vsel %vm431, %v436, %v435
      %vm438 = vcmp.lt.s32.totalorder %v322, 0
      %v439 = vsub.s32 0, %v322
      %v440 = vsel %vm438, %v439, %v322
      %v441 = vshrl.u32 %v440, 4
      %v442 = vand.u32 %v440, 15
      %v443 = vsub.s32 0, %v442
      %v444 = vsel %vm438, %v443, %v442
      %vm445 = vcmp.lt.s32.totalorder %v323, 0
      %v446 = vsub.s32 0, %v323
      %v447 = vsel %vm445, %v446, %v323
      %v448 = vshrl.u32 %v447, 4
      %v449 = vand.u32 %v447, 15
      %v450 = vsub.s32 0, %v449
      %v451 = vsel %vm445, %v450, %v449
      %vm452 = vcmp.lt.s32.totalorder %v324, 0
      %v453 = vsub.s32 0, %v324
      %v454 = vsel %vm452, %v453, %v324
      %v455 = vshrl.u32 %v454, 4
      %v456 = vand.u32 %v454, 15
      %v457 = vsub.s32 0, %v456
      %v458 = vsel %vm452, %v457, %v456
      %vm459 = vcmp.lt.s32.totalorder %v325, 0
      %v460 = vsub.s32 0, %v325
      %v461 = vsel %vm459, %v460, %v325
      %v462 = vshrl.u32 %v461, 4
      %v463 = vand.u32 %v461, 15
      %v464 = vsub.s32 0, %v463
      %v465 = vsel %vm459, %v464, %v463
      %vm466 = vcmp.lt.s32.totalorder %v326, 0
      %v467 = vsub.s32 0, %v326
      %v468 = vsel %vm466, %v467, %v326
      %v469 = vshrl.u32 %v468, 4
      %v470 = vand.u32 %v468, 15
      %v471 = vsub.s32 0, %v470
      %v472 = vsel %vm466, %v471, %v470
      %vm473 = vcmp.lt.s32.totalorder %v327, 0
      %v474 = vsub.s32 0, %v327
      %v475 = vsel %vm473, %v474, %v327
      %v476 = vshrl.u32 %v475, 4
      %v477 = vand.u32 %v475, 15
      %v478 = vsub.s32 0, %v477
      %v479 = vsel %vm473, %v478, %v477
      %vm480 = vcmp.lt.s32.totalorder %v328, 0
      %v481 = vsub.s32 0, %v328
      %v482 = vsel %vm480, %v481, %v328
      %v483 = vshrl.u32 %v482, 4
      %v484 = vand.u32 %v482, 15
      %v485 = vsub.s32 0, %v484
      %v486 = vsel %vm480, %v485, %v484
      %vm487 = vcmp.lt.s32.totalorder %v329, 0
      %v488 = vsub.s32 0, %v329
      %v489 = vsel %vm487, %v488, %v329
      %v490 = vshrl.u32 %v489, 4
      %v491 = vand.u32 %v489, 15
      %v492 = vsub.s32 0, %v491
      %v493 = vsel %vm487, %v492, %v491
      %vm494 = vcmp.lt.s32.totalorder %v330, 0
      %v495 = vsub.s32 0, %v330
      %v496 = vsel %vm494, %v495, %v330
      %v497 = vshrl.u32 %v496, 4
      %v498 = vand.u32 %v496, 15
      %v499 = vsub.s32 0, %v498
      %v500 = vsel %vm494, %v499, %v498
      %vm501 = vcmp.lt.s32.totalorder %v331, 0
      %v502 = vsub.s32 0, %v331
      %v503 = vsel %vm501, %v502, %v331
      %v504 = vshrl.u32 %v503, 4
      %v505 = vand.u32 %v503, 15
      %v506 = vsub.s32 0, %v505
      %v507 = vsel %vm501, %v506, %v505
      %vm508 = vcmp.lt.s32.totalorder %v332, 0
      %v509 = vsub.s32 0, %v332
      %v510 = vsel %vm508, %v509, %v332
      %v511 = vshrl.u32 %v510, 4
      %v512 = vand.u32 %v510, 15
      %v513 = vsub.s32 0, %v512
      %v514 = vsel %vm508, %v513, %v512
      %vm515 = vcmp.lt.s32.totalorder %v333, 0
      %v516 = vsub.s32 0, %v333
      %v517 = vsel %vm515, %v516, %v333
      %v518 = vshrl.u32 %v517, 4
      %v519 = vand.u32 %v517, 15
      %v520 = vsub.s32 0, %v519
      %v521 = vsel %vm515, %v520, %v519
      %vm522 = vcmp.lt.s32.totalorder %v334, 0
      %v523 = vsub.s32 0, %v334
      %v524 = vsel %vm522, %v523, %v334
      %v525 = vshrl.u32 %v524, 4
      %v526 = vand.u32 %v524, 15
      %v527 = vsub.s32 0, %v526
      %v528 = vsel %vm522, %v527, %v526
      %vm529 = vcmp.lt.s32.totalorder %v335, 0
      %v530 = vsub.s32 0, %v335
      %v531 = vsel %vm529, %v530, %v335
      %v532 = vshrl.u32 %v531, 4
      %v533 = vand.u32 %v531, 15
      %v534 = vsub.s32 0, %v533
      %v535 = vsel %vm529, %v534, %v533
      %vm536 = vcmp.lt.s32.totalorder %v336, 0
      %v537 = vsub.s32 0, %v336
      %v538 = vsel %vm536, %v537, %v336
      %v539 = vshrl.u32 %v538, 4
      %v540 = vand.u32 %v538, 15
      %v541 = vsub.s32 0, %v540
      %v542 = vsel %vm536, %v541, %v540
      %vm543 = vcmp.lt.s32.totalorder %v337, 0
      %v544 = vsub.s32 0, %v337
      %v545 = vsel %vm543, %v544, %v337
      %v546 = vshrl.u32 %v545, 4
      %v547 = vand.u32 %v545, 15
      %v548 = vsub.s32 0, %v547
      %v549 = vsel %vm543, %v548, %v547
      %vm550 = vcmp.lt.s32.totalorder %v338, 0
      %v551 = vsub.s32 0, %v338
      %v552 = vsel %vm550, %v551, %v338
      %v553 = vshrl.u32 %v552, 4
      %v554 = vand.u32 %v552, 15
      %v555 = vsub.s32 0, %v554
      %v556 = vsel %vm550, %v555, %v554
      %vm557 = vcmp.lt.s32.totalorder %v339, 0
      %v558 = vsub.s32 0, %v339
      %v559 = vsel %vm557, %v558, %v339
      %v560 = vshrl.u32 %v559, 4
      %v561 = vand.u32 %v559, 15
      %v562 = vsub.s32 0, %v561
      %v563 = vsel %vm557, %v562, %v561
      %vm564 = vcmp.ne.s32.totalorder %v346, 0
      %vm565 = vcmp.ne.s32.totalorder %v353, 0
      %vm566 = vcmp.ne.s32.totalorder %v360, 0
      %vm567 = vcmp.ne.s32.totalorder %v367, 0
      %vm568 = vcmp.ne.s32.totalorder %v374, 0
      %vm569 = vcmp.ne.s32.totalorder %v381, 0
      %vm570 = vcmp.ne.s32.totalorder %v388, 0
      %vm571 = vcmp.ne.s32.totalorder %v395, 0
      %vm572 = vcmp.ne.s32.totalorder %v402, 0
      %vm573 = vcmp.ne.s32.totalorder %v409, 0
      %vm574 = vcmp.ne.s32.totalorder %v416, 0
      %vm575 = vcmp.ne.s32.totalorder %v423, 0
      %vm576 = vcmp.ne.s32.totalorder %v430, 0
      %vm577 = vcmp.ne.s32.totalorder %v437, 0
      %vm578 = vcmp.ne.s32.totalorder %v444, 0
      %vm579 = vcmp.ne.s32.totalorder %v451, 0
      %vm580 = vcmp.ne.s32.totalorder %v458, 0
      %vm581 = vcmp.ne.s32.totalorder %v465, 0
      %vm582 = vcmp.ne.s32.totalorder %v472, 0
      %vm583 = vcmp.ne.s32.totalorder %v479, 0
      %vm584 = vcmp.ne.s32.totalorder %v486, 0
      %vm585 = vcmp.ne.s32.totalorder %v493, 0
      %vm586 = vcmp.ne.s32.totalorder %v500, 0
      %vm587 = vcmp.ne.s32.totalorder %v507, 0
      %vm588 = vcmp.ne.s32.totalorder %v514, 0
      %vm589 = vcmp.ne.s32.totalorder %v521, 0
      %vm590 = vcmp.ne.s32.totalorder %v528, 0
      %vm591 = vcmp.ne.s32.totalorder %v535, 0
      %vm592 = vcmp.ne.s32.totalorder %v542, 0
      %vm593 = vcmp.ne.s32.totalorder %v549, 0
      %vm594 = vcmp.ne.s32.totalorder %v556, 0
      %vm595 = vcmp.ne.s32.totalorder %v563, 0
      %vm596 = vcmp.lt.s32.totalorder %v346, 0
      %vm597 = vcmp.lt.s32.totalorder %v353, 0
      %vm598 = vcmp.lt.s32.totalorder %v360, 0
      %vm599 = vcmp.lt.s32.totalorder %v367, 0
      %vm600 = vcmp.lt.s32.totalorder %v374, 0
      %vm601 = vcmp.lt.s32.totalorder %v381, 0
      %vm602 = vcmp.lt.s32.totalorder %v388, 0
      %vm603 = vcmp.lt.s32.totalorder %v395, 0
      %vm604 = vcmp.lt.s32.totalorder %v402, 0
      %vm605 = vcmp.lt.s32.totalorder %v409, 0
      %vm606 = vcmp.lt.s32.totalorder %v416, 0
      %vm607 = vcmp.lt.s32.totalorder %v423, 0
      %vm608 = vcmp.lt.s32.totalorder %v430, 0
      %vm609 = vcmp.lt.s32.totalorder %v437, 0
      %vm610 = vcmp.lt.s32.totalorder %v444, 0
      %vm611 = vcmp.lt.s32.totalorder %v451, 0
      %vm612 = vcmp.lt.s32.totalorder %v458, 0
      %vm613 = vcmp.lt.s32.totalorder %v465, 0
      %vm614 = vcmp.lt.s32.totalorder %v472, 0
      %vm615 = vcmp.lt.s32.totalorder %v479, 0
      %vm616 = vcmp.lt.s32.totalorder %v486, 0
      %vm617 = vcmp.lt.s32.totalorder %v493, 0
      %vm618 = vcmp.lt.s32.totalorder %v500, 0
      %vm619 = vcmp.lt.s32.totalorder %v507, 0
      %vm620 = vcmp.lt.s32.totalorder %v514, 0
      %vm621 = vcmp.lt.s32.totalorder %v521, 0
      %vm622 = vcmp.lt.s32.totalorder %v528, 0
      %vm623 = vcmp.lt.s32.totalorder %v535, 0
      %vm624 = vcmp.lt.s32.totalorder %v542, 0
      %vm625 = vcmp.lt.s32.totalorder %v549, 0
      %vm626 = vcmp.lt.s32.totalorder %v556, 0
      %vm627 = vcmp.lt.s32.totalorder %v563, 0
      %vm628 = vmand %vm596, %vm564
      %vm629 = vmand %vm597, %vm565
      %vm630 = vmand %vm598, %vm566
      %vm631 = vmand %vm599, %vm567
      %vm632 = vmand %vm600, %vm568
      %vm633 = vmand %vm601, %vm569
      %vm634 = vmand %vm602, %vm570
      %vm635 = vmand %vm603, %vm571
      %vm636 = vmand %vm604, %vm572
      %vm637 = vmand %vm605, %vm573
      %vm638 = vmand %vm606, %vm574
      %vm639 = vmand %vm607, %vm575
      %vm640 = vmand %vm608, %vm576
      %vm641 = vmand %vm609, %vm577
      %vm642 = vmand %vm610, %vm578
      %vm643 = vmand %vm611, %vm579
      %vm644 = vmand %vm612, %vm580
      %vm645 = vmand %vm613, %vm581
      %vm646 = vmand %vm614, %vm582
      %vm647 = vmand %vm615, %vm583
      %vm648 = vmand %vm616, %vm584
      %vm649 = vmand %vm617, %vm585
      %vm650 = vmand %vm618, %vm586
      %vm651 = vmand %vm619, %vm587
      %vm652 = vmand %vm620, %vm588
      %vm653 = vmand %vm621, %vm589
      %vm654 = vmand %vm622, %vm590
      %vm655 = vmand %vm623, %vm591
      %vm656 = vmand %vm624, %vm592
      %vm657 = vmand %vm625, %vm593
      %vm658 = vmand %vm626, %vm594
      %vm659 = vmand %vm627, %vm595
      %v660 = vadd.s32 %v346, 16
      %v661 = vadd.s32 %v353, 16
      %v662 = vadd.s32 %v360, 16
      %v663 = vadd.s32 %v367, 16
      %v664 = vadd.s32 %v374, 16
      %v665 = vadd.s32 %v381, 16
      %v666 = vadd.s32 %v388, 16
      %v667 = vadd.s32 %v395, 16
      %v668 = vadd.s32 %v402, 16
      %v669 = vadd.s32 %v409, 16
      %v670 = vadd.s32 %v416, 16
      %v671 = vadd.s32 %v423, 16
      %v672 = vadd.s32 %v430, 16
      %v673 = vadd.s32 %v437, 16
      %v674 = vadd.s32 %v444, 16
      %v675 = vadd.s32 %v451, 16
      %v676 = vadd.s32 %v458, 16
      %v677 = vadd.s32 %v465, 16
      %v678 = vadd.s32 %v472, 16
      %v679 = vadd.s32 %v479, 16
      %v680 = vadd.s32 %v486, 16
      %v681 = vadd.s32 %v493, 16
      %v682 = vadd.s32 %v500, 16
      %v683 = vadd.s32 %v507, 16
      %v684 = vadd.s32 %v514, 16
      %v685 = vadd.s32 %v521, 16
      %v686 = vadd.s32 %v528, 16
      %v687 = vadd.s32 %v535, 16
      %v688 = vadd.s32 %v542, 16
      %v689 = vadd.s32 %v549, 16
      %v690 = vadd.s32 %v556, 16
      %v691 = vadd.s32 %v563, 16
      %v692 = vsel %vm628, %v660, %v346
      %v693 = vsel %vm629, %v661, %v353
      %v694 = vsel %vm630, %v662, %v360
      %v695 = vsel %vm631, %v663, %v367
      %v696 = vsel %vm632, %v664, %v374
      %v697 = vsel %vm633, %v665, %v381
      %v698 = vsel %vm634, %v666, %v388
      %v699 = vsel %vm635, %v667, %v395
      %v700 = vsel %vm636, %v668, %v402
      %v701 = vsel %vm637, %v669, %v409
      %v702 = vsel %vm638, %v670, %v416
      %v703 = vsel %vm639, %v671, %v423
      %v704 = vsel %vm640, %v672, %v430
      %v705 = vsel %vm641, %v673, %v437
      %v706 = vsel %vm642, %v674, %v444
      %v707 = vsel %vm643, %v675, %v451
      %v708 = vsel %vm644, %v676, %v458
      %v709 = vsel %vm645, %v677, %v465
      %v710 = vsel %vm646, %v678, %v472
      %v711 = vsel %vm647, %v679, %v479
      %v712 = vsel %vm648, %v680, %v486
      %v713 = vsel %vm649, %v681, %v493
      %v714 = vsel %vm650, %v682, %v500
      %v715 = vsel %vm651, %v683, %v507
      %v716 = vsel %vm652, %v684, %v514
      %v717 = vsel %vm653, %v685, %v521
      %v718 = vsel %vm654, %v686, %v528
      %v719 = vsel %vm655, %v687, %v535
      %v720 = vsel %vm656, %v688, %v542
      %v721 = vsel %vm657, %v689, %v549
      %v722 = vsel %vm658, %v690, %v556
      %v723 = vsel %vm659, %v691, %v563
      %v724 = vld [vmem:[#allocation2 + $0x7] sm:$0xff]
      %v725 = vld [vmem:[#allocation2 + $0xf] sm:$0xff]
      %v726 = vld [vmem:[#allocation2 + $0x17] sm:$0xff]
      %v727 = vld [vmem:[#allocation2 + $0x1f] sm:$0xff]
      %v728 = vld [vmem:[#allocation2 + $0x27] sm:$0xff]
      %v729 = vld [vmem:[#allocation2 + $0x2f] sm:$0xff]
      %v730 = vld [vmem:[#allocation2 + $0x37] sm:$0xff]
      %v731 = vld [vmem:[#allocation2 + $0x3f] sm:$0xff]
      %v732 = vld [vmem:[#allocation2 + $0x47] sm:$0xff]
      %v733 = vld [vmem:[#allocation2 + $0x4f] sm:$0xff]
      %v734 = vld [vmem:[#allocation2 + $0x57] sm:$0xff]
      %v735 = vld [vmem:[#allocation2 + $0x5f] sm:$0xff]
      %v736 = vld [vmem:[#allocation2 + $0x67] sm:$0xff]
      %v737 = vld [vmem:[#allocation2 + $0x6f] sm:$0xff]
      %v738 = vld [vmem:[#allocation2 + $0x77] sm:$0xff]
      %v739 = vld [vmem:[#allocation2 + $0x7f] sm:$0xff]
      %v740 = vld [vmem:[#allocation2 + $0x87] sm:$0xff]
      %v741 = vld [vmem:[#allocation2 + $0x8f] sm:$0xff]
      %v742 = vld [vmem:[#allocation2 + $0x97] sm:$0xff]
      %v743 = vld [vmem:[#allocation2 + $0x9f] sm:$0xff]
      %v744 = vld [vmem:[#allocation2 + $0xa7] sm:$0xff]
      %v745 = vld [vmem:[#allocation2 + $0xaf] sm:$0xff]
      %v746 = vld [vmem:[#allocation2 + $0xb7] sm:$0xff]
      %v747 = vld [vmem:[#allocation2 + $0xbf] sm:$0xff]
      %v748 = vld [vmem:[#allocation2 + $0xc7] sm:$0xff]
      %v749 = vld [vmem:[#allocation2 + $0xcf] sm:$0xff]
      %v750 = vld [vmem:[#allocation2 + $0xd7] sm:$0xff]
      %v751 = vld [vmem:[#allocation2 + $0xdf] sm:$0xff]
      %v752 = vld [vmem:[#allocation2 + $0xe7] sm:$0xff]
      %v753 = vld [vmem:[#allocation2 + $0xef] sm:$0xff]
      %v754 = vld [vmem:[#allocation2 + $0xf7] sm:$0xff]
      %v755 = vld [vmem:[#allocation2 + $0xff] sm:$0xff]
      %v756 = vlaneseq
      %v757 = vshrl.u32 %v756, 7
      %v758 = vsub.s32 0, %v757
      %v759 = vrot.slane %v233, %v758
      %v760 = vmul.f32 %v724, %v759
      %v761 = vmul.f32 %v725, %v759
      %v762 = vmul.f32 %v726, %v759
      %v763 = vmul.f32 %v727, %v759
      %v764 = vmul.f32 %v728, %v759
      %v765 = vmul.f32 %v729, %v759
      %v766 = vmul.f32 %v730, %v759
      %v767 = vmul.f32 %v731, %v759
      %v768 = vmul.f32 %v732, %v759
      %v769 = vmul.f32 %v733, %v759
      %v770 = vmul.f32 %v734, %v759
      %v771 = vmul.f32 %v735, %v759
      %v772 = vmul.f32 %v736, %v759
      %v773 = vmul.f32 %v737, %v759
      %v774 = vmul.f32 %v738, %v759
      %v775 = vmul.f32 %v739, %v759
      %v776 = vmul.f32 %v740, %v759
      %v777 = vmul.f32 %v741, %v759
      %v778 = vmul.f32 %v742, %v759
      %v779 = vmul.f32 %v743, %v759
      %v780 = vmul.f32 %v744, %v759
      %v781 = vmul.f32 %v745, %v759
      %v782 = vmul.f32 %v746, %v759
      %v783 = vmul.f32 %v747, %v759
      %v784 = vmul.f32 %v748, %v759
      %v785 = vmul.f32 %v749, %v759
      %v786 = vmul.f32 %v750, %v759
      %v787 = vmul.f32 %v751, %v759
      %v788 = vmul.f32 %v752, %v759
      %v789 = vmul.f32 %v753, %v759
      %v790 = vmul.f32 %v754, %v759
      %v791 = vmul.f32 %v755, %v759
      %v792 = vld [vmem:[#allocation2 + $0x107] sm:$0xff]
      %v793 = vld [vmem:[#allocation2 + $0x10f] sm:$0xff]
      %v794 = vlaneseq
      %v795 = vshrl.u32 %v794, 7
      %v796 = vsub.s32 3, %v795
      %v797 = vrot.slane %v233, %v796
      %v798 = vmul.f32 %v726, %v797
      %v799 = vmul.f32 %v727, %v797
      %v800 = vmul.f32 %v728, %v797
      %v801 = vmul.f32 %v729, %v797
      %v802 = vmul.f32 %v730, %v797
      %v803 = vmul.f32 %v731, %v797
      %v804 = vmul.f32 %v732, %v797
      %v805 = vmul.f32 %v733, %v797
      %v806 = vmul.f32 %v734, %v797
      %v807 = vmul.f32 %v735, %v797
      %v808 = vmul.f32 %v736, %v797
      %v809 = vmul.f32 %v737, %v797
      %v810 = vmul.f32 %v738, %v797
      %v811 = vmul.f32 %v739, %v797
      %v812 = vmul.f32 %v740, %v797
      %v813 = vmul.f32 %v741, %v797
      %v814 = vmul.f32 %v742, %v797
      %v815 = vmul.f32 %v743, %v797
      %v816 = vmul.f32 %v744, %v797
      %v817 = vmul.f32 %v745, %v797
      %v818 = vmul.f32 %v746, %v797
      %v819 = vmul.f32 %v747, %v797
      %v820 = vmul.f32 %v748, %v797
      %v821 = vmul.f32 %v749, %v797
      %v822 = vmul.f32 %v750, %v797
      %v823 = vmul.f32 %v751, %v797
      %v824 = vmul.f32 %v752, %v797
      %v825 = vmul.f32 %v753, %v797
      %v826 = vmul.f32 %v754, %v797
      %v827 = vmul.f32 %v755, %v797
      %v828 = vmul.f32 %v792, %v797
      %v829 = vmul.f32 %v793, %v797
      %v830 = vadd.f32 %v760, %v798
      %v831 = vadd.f32 %v761, %v799
      %v832 = vadd.f32 %v762, %v800
      %v833 = vadd.f32 %v763, %v801
      %v834 = vadd.f32 %v764, %v802
      %v835 = vadd.f32 %v765, %v803
      %v836 = vadd.f32 %v766, %v804
      %v837 = vadd.f32 %v767, %v805
      %v838 = vadd.f32 %v768, %v806
      %v839 = vadd.f32 %v769, %v807
      %v840 = vadd.f32 %v770, %v808
      %v841 = vadd.f32 %v771, %v809
      %v842 = vadd.f32 %v772, %v810
      %v843 = vadd.f32 %v773, %v811
      %v844 = vadd.f32 %v774, %v812
      %v845 = vadd.f32 %v775, %v813
      %v846 = vadd.f32 %v776, %v814
      %v847 = vadd.f32 %v777, %v815
      %v848 = vadd.f32 %v778, %v816
      %v849 = vadd.f32 %v779, %v817
      %v850 = vadd.f32 %v780, %v818
      %v851 = vadd.f32 %v781, %v819
      %v852 = vadd.f32 %v782, %v820
      %v853 = vadd.f32 %v783, %v821
      %v854 = vadd.f32 %v784, %v822
      %v855 = vadd.f32 %v785, %v823
      %v856 = vadd.f32 %v786, %v824
      %v857 = vadd.f32 %v787, %v825
      %v858 = vadd.f32 %v788, %v826
      %v859 = vadd.f32 %v789, %v827
      %v860 = vadd.f32 %v790, %v828
      %v861 = vadd.f32 %v791, %v829
      %v862 = vld [vmem:[#allocation2 + $0x117] sm:$0xff]
      %v863 = vld [vmem:[#allocation2 + $0x11f] sm:$0xff]
      %v864 = vlaneseq
      %v865 = vshrl.u32 %v864, 7
      %v866 = vsub.s32 6, %v865
      %v867 = vrot.slane %v233, %v866
      %v868 = vmul.f32 %v728, %v867
      %v869 = vmul.f32 %v729, %v867
      %v870 = vmul.f32 %v730, %v867
      %v871 = vmul.f32 %v731, %v867
      %v872 = vmul.f32 %v732, %v867
      %v873 = vmul.f32 %v733, %v867
      %v874 = vmul.f32 %v734, %v867
      %v875 = vmul.f32 %v735, %v867
      %v876 = vmul.f32 %v736, %v867
      %v877 = vmul.f32 %v737, %v867
      %v878 = vmul.f32 %v738, %v867
      %v879 = vmul.f32 %v739, %v867
      %v880 = vmul.f32 %v740, %v867
      %v881 = vmul.f32 %v741, %v867
      %v882 = vmul.f32 %v742, %v867
      %v883 = vmul.f32 %v743, %v867
      %v884 = vmul.f32 %v744, %v867
      %v885 = vmul.f32 %v745, %v867
      %v886 = vmul.f32 %v746, %v867
      %v887 = vmul.f32 %v747, %v867
      %v888 = vmul.f32 %v748, %v867
      %v889 = vmul.f32 %v749, %v867
      %v890 = vmul.f32 %v750, %v867
      %v891 = vmul.f32 %v751, %v867
      %v892 = vmul.f32 %v752, %v867
      %v893 = vmul.f32 %v753, %v867
      %v894 = vmul.f32 %v754, %v867
      %v895 = vmul.f32 %v755, %v867
      %v896 = vmul.f32 %v792, %v867
      %v897 = vmul.f32 %v793, %v867
      %v898 = vmul.f32 %v862, %v867
      %v899 = vmul.f32 %v863, %v867
      %v900 = vadd.f32 %v830, %v868
      %v901 = vadd.f32 %v831, %v869
      %v902 = vadd.f32 %v832, %v870
      %v903 = vadd.f32 %v833, %v871
      %v904 = vadd.f32 %v834, %v872
      %v905 = vadd.f32 %v835, %v873
      %v906 = vadd.f32 %v836, %v874
      %v907 = vadd.f32 %v837, %v875
      %v908 = vadd.f32 %v838, %v876
      %v909 = vadd.f32 %v839, %v877
      %v910 = vadd.f32 %v840, %v878
      %v911 = vadd.f32 %v841, %v879
      %v912 = vadd.f32 %v842, %v880
      %v913 = vadd.f32 %v843, %v881
      %v914 = vadd.f32 %v844, %v882
      %v915 = vadd.f32 %v845, %v883
      %v916 = vadd.f32 %v846, %v884
      %v917 = vadd.f32 %v847, %v885
      %v918 = vadd.f32 %v848, %v886
      %v919 = vadd.f32 %v849, %v887
      %v920 = vadd.f32 %v850, %v888
      %v921 = vadd.f32 %v851, %v889
      %v922 = vadd.f32 %v852, %v890
      %v923 = vadd.f32 %v853, %v891
      %v924 = vadd.f32 %v854, %v892
      %v925 = vadd.f32 %v855, %v893
      %v926 = vadd.f32 %v856, %v894
      %v927 = vadd.f32 %v857, %v895
      %v928 = vadd.f32 %v858, %v896
      %v929 = vadd.f32 %v859, %v897
      %v930 = vadd.f32 %v860, %v898
      %v931 = vadd.f32 %v861, %v899
      %vm932 = vcmp.eq.s32.totalorder %v692, 0
      %vm933 = vcmp.eq.s32.totalorder %v693, 0
      %vm934 = vcmp.eq.s32.totalorder %v694, 0
      %vm935 = vcmp.eq.s32.totalorder %v695, 0
      %vm936 = vcmp.eq.s32.totalorder %v696, 0
      %vm937 = vcmp.eq.s32.totalorder %v697, 0
      %vm938 = vcmp.eq.s32.totalorder %v698, 0
      %vm939 = vcmp.eq.s32.totalorder %v699, 0
      %vm940 = vcmp.eq.s32.totalorder %v700, 0
      %vm941 = vcmp.eq.s32.totalorder %v701, 0
      %vm942 = vcmp.eq.s32.totalorder %v702, 0
      %vm943 = vcmp.eq.s32.totalorder %v703, 0
      %vm944 = vcmp.eq.s32.totalorder %v704, 0
      %vm945 = vcmp.eq.s32.totalorder %v705, 0
      %vm946 = vcmp.eq.s32.totalorder %v706, 0
      %vm947 = vcmp.eq.s32.totalorder %v707, 0
      %vm948 = vcmp.eq.s32.totalorder %v708, 0
      %vm949 = vcmp.eq.s32.totalorder %v709, 0
      %vm950 = vcmp.eq.s32.totalorder %v710, 0
      %vm951 = vcmp.eq.s32.totalorder %v711, 0
      %vm952 = vcmp.eq.s32.totalorder %v712, 0
      %vm953 = vcmp.eq.s32.totalorder %v713, 0
      %vm954 = vcmp.eq.s32.totalorder %v714, 0
      %vm955 = vcmp.eq.s32.totalorder %v715, 0
      %vm956 = vcmp.eq.s32.totalorder %v716, 0
      %vm957 = vcmp.eq.s32.totalorder %v717, 0
      %vm958 = vcmp.eq.s32.totalorder %v718, 0
      %vm959 = vcmp.eq.s32.totalorder %v719, 0
      %vm960 = vcmp.eq.s32.totalorder %v720, 0
      %vm961 = vcmp.eq.s32.totalorder %v721, 0
      %vm962 = vcmp.eq.s32.totalorder %v722, 0
      %vm963 = vcmp.eq.s32.totalorder %v723, 0
      %v964 = vsel %vm932, 1, 0
      %v965 = vsel %vm933, 1, 0
      %v966 = vsel %vm934, 1, 0
      %v967 = vsel %vm935, 1, 0
      %v968 = vsel %vm936, 1, 0
      %v969 = vsel %vm937, 1, 0
      %v970 = vsel %vm938, 1, 0
      %v971 = vsel %vm939, 1, 0
      %v972 = vsel %vm940, 1, 0
      %v973 = vsel %vm941, 1, 0
      %v974 = vsel %vm942, 1, 0
      %v975 = vsel %vm943, 1, 0
      %v976 = vsel %vm944, 1, 0
      %v977 = vsel %vm945, 1, 0
      %v978 = vsel %vm946, 1, 0
      %v979 = vsel %vm947, 1, 0
      %v980 = vsel %vm948, 1, 0
      %v981 = vsel %vm949, 1, 0
      %v982 = vsel %vm950, 1, 0
      %v983 = vsel %vm951, 1, 0
      %v984 = vsel %vm952, 1, 0
      %v985 = vsel %vm953, 1, 0
      %v986 = vsel %vm954, 1, 0
      %v987 = vsel %vm955, 1, 0
      %v988 = vsel %vm956, 1, 0
      %v989 = vsel %vm957, 1, 0
      %v990 = vsel %vm958, 1, 0
      %v991 = vsel %vm959, 1, 0
      %v992 = vsel %vm960, 1, 0
      %v993 = vsel %vm961, 1, 0
      %v994 = vsel %vm962, 1, 0
      %v995 = vsel %vm963, 1, 0
      %vm996 = vcmp.eq.s32.totalorder %v964, 1
      %vm997 = vcmp.eq.s32.totalorder %v965, 1
      %vm998 = vcmp.eq.s32.totalorder %v966, 1
      %vm999 = vcmp.eq.s32.totalorder %v967, 1
      %vm1000 = vcmp.eq.s32.totalorder %v968, 1
      %vm1001 = vcmp.eq.s32.totalorder %v969, 1
      %vm1002 = vcmp.eq.s32.totalorder %v970, 1
      %vm1003 = vcmp.eq.s32.totalorder %v971, 1
      %vm1004 = vcmp.eq.s32.totalorder %v972, 1
      %vm1005 = vcmp.eq.s32.totalorder %v973, 1
      %vm1006 = vcmp.eq.s32.totalorder %v974, 1
      %vm1007 = vcmp.eq.s32.totalorder %v975, 1
      %vm1008 = vcmp.eq.s32.totalorder %v976, 1
      %vm1009 = vcmp.eq.s32.totalorder %v977, 1
      %vm1010 = vcmp.eq.s32.totalorder %v978, 1
      %vm1011 = vcmp.eq.s32.totalorder %v979, 1
      %vm1012 = vcmp.eq.s32.totalorder %v980, 1
      %vm1013 = vcmp.eq.s32.totalorder %v981, 1
      %vm1014 = vcmp.eq.s32.totalorder %v982, 1
      %vm1015 = vcmp.eq.s32.totalorder %v983, 1
      %vm1016 = vcmp.eq.s32.totalorder %v984, 1
      %vm1017 = vcmp.eq.s32.totalorder %v985, 1
      %vm1018 = vcmp.eq.s32.totalorder %v986, 1
      %vm1019 = vcmp.eq.s32.totalorder %v987, 1
      %vm1020 = vcmp.eq.s32.totalorder %v988, 1
      %vm1021 = vcmp.eq.s32.totalorder %v989, 1
      %vm1022 = vcmp.eq.s32.totalorder %v990, 1
      %vm1023 = vcmp.eq.s32.totalorder %v991, 1
      %vm1024 = vcmp.eq.s32.totalorder %v992, 1
      %vm1025 = vcmp.eq.s32.totalorder %v993, 1
      %vm1026 = vcmp.eq.s32.totalorder %v994, 1
      %vm1027 = vcmp.eq.s32.totalorder %v995, 1
      %v1028 = vsel %vm996, 0.0, %v900
      %v1029 = vsel %vm997, 0.0, %v901
      %v1030 = vsel %vm998, 0.0, %v902
      %v1031 = vsel %vm999, 0.0, %v903
      %v1032 = vsel %vm1000, 0.0, %v904
      %v1033 = vsel %vm1001, 0.0, %v905
      %v1034 = vsel %vm1002, 0.0, %v906
      %v1035 = vsel %vm1003, 0.0, %v907
      %v1036 = vsel %vm1004, 0.0, %v908
      %v1037 = vsel %vm1005, 0.0, %v909
      %v1038 = vsel %vm1006, 0.0, %v910
      %v1039 = vsel %vm1007, 0.0, %v911
      %v1040 = vsel %vm1008, 0.0, %v912
      %v1041 = vsel %vm1009, 0.0, %v913
      %v1042 = vsel %vm1010, 0.0, %v914
      %v1043 = vsel %vm1011, 0.0, %v915
      %v1044 = vsel %vm1012, 0.0, %v916
      %v1045 = vsel %vm1013, 0.0, %v917
      %v1046 = vsel %vm1014, 0.0, %v918
      %v1047 = vsel %vm1015, 0.0, %v919
      %v1048 = vsel %vm1016, 0.0, %v920
      %v1049 = vsel %vm1017, 0.0, %v921
      %v1050 = vsel %vm1018, 0.0, %v922
      %v1051 = vsel %vm1019, 0.0, %v923
      %v1052 = vsel %vm1020, 0.0, %v924
      %v1053 = vsel %vm1021, 0.0, %v925
      %v1054 = vsel %vm1022, 0.0, %v926
      %v1055 = vsel %vm1023, 0.0, %v927
      %v1056 = vsel %vm1024, 0.0, %v928
      %v1057 = vsel %vm1025, 0.0, %v929
      %v1058 = vsel %vm1026, 0.0, %v930
      %v1059 = vsel %vm1027, 0.0, %v931
      %v1060 = vld [vmem:[#allocation2 + $0x8] sm:$0xff]
      %v1061 = vld [vmem:[#allocation2 + $0x10] sm:$0xff]
      %v1062 = vld [vmem:[#allocation2 + $0x18] sm:$0xff]
      %v1063 = vld [vmem:[#allocation2 + $0x20] sm:$0xff]
      %v1064 = vld [vmem:[#allocation2 + $0x28] sm:$0xff]
      %v1065 = vld [vmem:[#allocation2 + $0x30] sm:$0xff]
      %v1066 = vld [vmem:[#allocation2 + $0x38] sm:$0xff]
      %v1067 = vld [vmem:[#allocation2 + $0x40] sm:$0xff]
      %v1068 = vld [vmem:[#allocation2 + $0x48] sm:$0xff]
      %v1069 = vld [vmem:[#allocation2 + $0x50] sm:$0xff]
      %v1070 = vld [vmem:[#allocation2 + $0x58] sm:$0xff]
      %v1071 = vld [vmem:[#allocation2 + $0x60] sm:$0xff]
      %v1072 = vld [vmem:[#allocation2 + $0x68] sm:$0xff]
      %v1073 = vld [vmem:[#allocation2 + $0x70] sm:$0xff]
      %v1074 = vld [vmem:[#allocation2 + $0x78] sm:$0xff]
      %v1075 = vld [vmem:[#allocation2 + $0x80] sm:$0xff]
      %v1076 = vld [vmem:[#allocation2 + $0x88] sm:$0xff]
      %v1077 = vld [vmem:[#allocation2 + $0x90] sm:$0xff]
      %v1078 = vld [vmem:[#allocation2 + $0x98] sm:$0xff]
      %v1079 = vld [vmem:[#allocation2 + $0xa0] sm:$0xff]
      %v1080 = vld [vmem:[#allocation2 + $0xa8] sm:$0xff]
      %v1081 = vld [vmem:[#allocation2 + $0xb0] sm:$0xff]
      %v1082 = vld [vmem:[#allocation2 + $0xb8] sm:$0xff]
      %v1083 = vld [vmem:[#allocation2 + $0xc0] sm:$0xff]
      %v1084 = vld [vmem:[#allocation2 + $0xc8] sm:$0xff]
      %v1085 = vld [vmem:[#allocation2 + $0xd0] sm:$0xff]
      %v1086 = vld [vmem:[#allocation2 + $0xd8] sm:$0xff]
      %v1087 = vld [vmem:[#allocation2 + $0xe0] sm:$0xff]
      %v1088 = vld [vmem:[#allocation2 + $0xe8] sm:$0xff]
      %v1089 = vld [vmem:[#allocation2 + $0xf0] sm:$0xff]
      %v1090 = vld [vmem:[#allocation2 + $0xf8] sm:$0xff]
      %v1091 = vld [vmem:[#allocation2 + $0x100] sm:$0xff]
      %v1092 = vlaneseq
      %v1093 = vshrl.u32 %v1092, 7
      %v1094 = vsub.s32 1, %v1093
      %v1095 = vrot.slane %v233, %v1094
      %v1096 = vmul.f32 %v1060, %v1095
      %v1097 = vmul.f32 %v1061, %v1095
      %v1098 = vmul.f32 %v1062, %v1095
      %v1099 = vmul.f32 %v1063, %v1095
      %v1100 = vmul.f32 %v1064, %v1095
      %v1101 = vmul.f32 %v1065, %v1095
      %v1102 = vmul.f32 %v1066, %v1095
      %v1103 = vmul.f32 %v1067, %v1095
      %v1104 = vmul.f32 %v1068, %v1095
      %v1105 = vmul.f32 %v1069, %v1095
      %v1106 = vmul.f32 %v1070, %v1095
      %v1107 = vmul.f32 %v1071, %v1095
      %v1108 = vmul.f32 %v1072, %v1095
      %v1109 = vmul.f32 %v1073, %v1095
      %v1110 = vmul.f32 %v1074, %v1095
      %v1111 = vmul.f32 %v1075, %v1095
      %v1112 = vmul.f32 %v1076, %v1095
      %v1113 = vmul.f32 %v1077, %v1095
      %v1114 = vmul.f32 %v1078, %v1095
      %v1115 = vmul.f32 %v1079, %v1095
      %v1116 = vmul.f32 %v1080, %v1095
      %v1117 = vmul.f32 %v1081, %v1095
      %v1118 = vmul.f32 %v1082, %v1095
      %v1119 = vmul.f32 %v1083, %v1095
      %v1120 = vmul.f32 %v1084, %v1095
      %v1121 = vmul.f32 %v1085, %v1095
      %v1122 = vmul.f32 %v1086, %v1095
      %v1123 = vmul.f32 %v1087, %v1095
      %v1124 = vmul.f32 %v1088, %v1095
      %v1125 = vmul.f32 %v1089, %v1095
      %v1126 = vmul.f32 %v1090, %v1095
      %v1127 = vmul.f32 %v1091, %v1095
      %v1128 = vld [vmem:[#allocation2 + $0x108] sm:$0xff]
      %v1129 = vld [vmem:[#allocation2 + $0x110] sm:$0xff]
      %v1130 = vlaneseq
      %v1131 = vshrl.u32 %v1130, 7
      %v1132 = vsub.s32 4, %v1131
      %v1133 = vrot.slane %v233, %v1132
      %v1134 = vmul.f32 %v1062, %v1133
      %v1135 = vmul.f32 %v1063, %v1133
      %v1136 = vmul.f32 %v1064, %v1133
      %v1137 = vmul.f32 %v1065, %v1133
      %v1138 = vmul.f32 %v1066, %v1133
      %v1139 = vmul.f32 %v1067, %v1133
      %v1140 = vmul.f32 %v1068, %v1133
      %v1141 = vmul.f32 %v1069, %v1133
      %v1142 = vmul.f32 %v1070, %v1133
      %v1143 = vmul.f32 %v1071, %v1133
      %v1144 = vmul.f32 %v1072, %v1133
      %v1145 = vmul.f32 %v1073, %v1133
      %v1146 = vmul.f32 %v1074, %v1133
      %v1147 = vmul.f32 %v1075, %v1133
      %v1148 = vmul.f32 %v1076, %v1133
      %v1149 = vmul.f32 %v1077, %v1133
      %v1150 = vmul.f32 %v1078, %v1133
      %v1151 = vmul.f32 %v1079, %v1133
      %v1152 = vmul.f32 %v1080, %v1133
      %v1153 = vmul.f32 %v1081, %v1133
      %v1154 = vmul.f32 %v1082, %v1133
      %v1155 = vmul.f32 %v1083, %v1133
      %v1156 = vmul.f32 %v1084, %v1133
      %v1157 = vmul.f32 %v1085, %v1133
      %v1158 = vmul.f32 %v1086, %v1133
      %v1159 = vmul.f32 %v1087, %v1133
      %v1160 = vmul.f32 %v1088, %v1133
      %v1161 = vmul.f32 %v1089, %v1133
      %v1162 = vmul.f32 %v1090, %v1133
      %v1163 = vmul.f32 %v1091, %v1133
      %v1164 = vmul.f32 %v1128, %v1133
      %v1165 = vmul.f32 %v1129, %v1133
      %v1166 = vadd.f32 %v1096, %v1134
      %v1167 = vadd.f32 %v1097, %v1135
      %v1168 = vadd.f32 %v1098, %v1136
      %v1169 = vadd.f32 %v1099, %v1137
      %v1170 = vadd.f32 %v1100, %v1138
      %v1171 = vadd.f32 %v1101, %v1139
      %v1172 = vadd.f32 %v1102, %v1140
      %v1173 = vadd.f32 %v1103, %v1141
      %v1174 = vadd.f32 %v1104, %v1142
      %v1175 = vadd.f32 %v1105, %v1143
      %v1176 = vadd.f32 %v1106, %v1144
      %v1177 = vadd.f32 %v1107, %v1145
      %v1178 = vadd.f32 %v1108, %v1146
      %v1179 = vadd.f32 %v1109, %v1147
      %v1180 = vadd.f32 %v1110, %v1148
      %v1181 = vadd.f32 %v1111, %v1149
      %v1182 = vadd.f32 %v1112, %v1150
      %v1183 = vadd.f32 %v1113, %v1151
      %v1184 = vadd.f32 %v1114, %v1152
      %v1185 = vadd.f32 %v1115, %v1153
      %v1186 = vadd.f32 %v1116, %v1154
      %v1187 = vadd.f32 %v1117, %v1155
      %v1188 = vadd.f32 %v1118, %v1156
      %v1189 = vadd.f32 %v1119, %v1157
      %v1190 = vadd.f32 %v1120, %v1158
      %v1191 = vadd.f32 %v1121, %v1159
      %v1192 = vadd.f32 %v1122, %v1160
      %v1193 = vadd.f32 %v1123, %v1161
      %v1194 = vadd.f32 %v1124, %v1162
      %v1195 = vadd.f32 %v1125, %v1163
      %v1196 = vadd.f32 %v1126, %v1164
      %v1197 = vadd.f32 %v1127, %v1165
      %v1198 = vld [vmem:[#allocation2 + $0x118] sm:$0xff]
      %v1199 = vld [vmem:[#allocation2 + $0x120] sm:$0xff]
      %v1200 = vlaneseq
      %v1201 = vshrl.u32 %v1200, 7
      %v1202 = vsub.s32 7, %v1201
      %v1203 = vrot.slane %v233, %v1202
      %v1204 = vmul.f32 %v1064, %v1203
      %v1205 = vmul.f32 %v1065, %v1203
      %v1206 = vmul.f32 %v1066, %v1203
      %v1207 = vmul.f32 %v1067, %v1203
      %v1208 = vmul.f32 %v1068, %v1203
      %v1209 = vmul.f32 %v1069, %v1203
      %v1210 = vmul.f32 %v1070, %v1203
      %v1211 = vmul.f32 %v1071, %v1203
      %v1212 = vmul.f32 %v1072, %v1203
      %v1213 = vmul.f32 %v1073, %v1203
      %v1214 = vmul.f32 %v1074, %v1203
      %v1215 = vmul.f32 %v1075, %v1203
      %v1216 = vmul.f32 %v1076, %v1203
      %v1217 = vmul.f32 %v1077, %v1203
      %v1218 = vmul.f32 %v1078, %v1203
      %v1219 = vmul.f32 %v1079, %v1203
      %v1220 = vmul.f32 %v1080, %v1203
      %v1221 = vmul.f32 %v1081, %v1203
      %v1222 = vmul.f32 %v1082, %v1203
      %v1223 = vmul.f32 %v1083, %v1203
      %v1224 = vmul.f32 %v1084, %v1203
      %v1225 = vmul.f32 %v1085, %v1203
      %v1226 = vmul.f32 %v1086, %v1203
      %v1227 = vmul.f32 %v1087, %v1203
      %v1228 = vmul.f32 %v1088, %v1203
      %v1229 = vmul.f32 %v1089, %v1203
      %v1230 = vmul.f32 %v1090, %v1203
      %v1231 = vmul.f32 %v1091, %v1203
      %v1232 = vmul.f32 %v1128, %v1203
      %v1233 = vmul.f32 %v1129, %v1203
      %v1234 = vmul.f32 %v1198, %v1203
      %v1235 = vmul.f32 %v1199, %v1203
      %v1236 = vadd.f32 %v1166, %v1204
      %v1237 = vadd.f32 %v1167, %v1205
      %v1238 = vadd.f32 %v1168, %v1206
      %v1239 = vadd.f32 %v1169, %v1207
      %v1240 = vadd.f32 %v1170, %v1208
      %v1241 = vadd.f32 %v1171, %v1209
      %v1242 = vadd.f32 %v1172, %v1210
      %v1243 = vadd.f32 %v1173, %v1211
      %v1244 = vadd.f32 %v1174, %v1212
      %v1245 = vadd.f32 %v1175, %v1213
      %v1246 = vadd.f32 %v1176, %v1214
      %v1247 = vadd.f32 %v1177, %v1215
      %v1248 = vadd.f32 %v1178, %v1216
      %v1249 = vadd.f32 %v1179, %v1217
      %v1250 = vadd.f32 %v1180, %v1218
      %v1251 = vadd.f32 %v1181, %v1219
      %v1252 = vadd.f32 %v1182, %v1220
      %v1253 = vadd.f32 %v1183, %v1221
      %v1254 = vadd.f32 %v1184, %v1222
      %v1255 = vadd.f32 %v1185, %v1223
      %v1256 = vadd.f32 %v1186, %v1224
      %v1257 = vadd.f32 %v1187, %v1225
      %v1258 = vadd.f32 %v1188, %v1226
      %v1259 = vadd.f32 %v1189, %v1227
      %v1260 = vadd.f32 %v1190, %v1228
      %v1261 = vadd.f32 %v1191, %v1229
      %v1262 = vadd.f32 %v1192, %v1230
      %v1263 = vadd.f32 %v1193, %v1231
      %v1264 = vadd.f32 %v1194, %v1232
      %v1265 = vadd.f32 %v1195, %v1233
      %v1266 = vadd.f32 %v1196, %v1234
      %v1267 = vadd.f32 %v1197, %v1235
      %v1268 = vadd.f32 %v1028, %v1236
      %v1269 = vadd.f32 %v1029, %v1237
      %v1270 = vadd.f32 %v1030, %v1238
      %v1271 = vadd.f32 %v1031, %v1239
      %v1272 = vadd.f32 %v1032, %v1240
      %v1273 = vadd.f32 %v1033, %v1241
      %v1274 = vadd.f32 %v1034, %v1242
      %v1275 = vadd.f32 %v1035, %v1243
      %v1276 = vadd.f32 %v1036, %v1244
      %v1277 = vadd.f32 %v1037, %v1245
      %v1278 = vadd.f32 %v1038, %v1246
      %v1279 = vadd.f32 %v1039, %v1247
      %v1280 = vadd.f32 %v1040, %v1248
      %v1281 = vadd.f32 %v1041, %v1249
      %v1282 = vadd.f32 %v1042, %v1250
      %v1283 = vadd.f32 %v1043, %v1251
      %v1284 = vadd.f32 %v1044, %v1252
      %v1285 = vadd.f32 %v1045, %v1253
      %v1286 = vadd.f32 %v1046, %v1254
      %v1287 = vadd.f32 %v1047, %v1255
      %v1288 = vadd.f32 %v1048, %v1256
      %v1289 = vadd.f32 %v1049, %v1257
      %v1290 = vadd.f32 %v1050, %v1258
      %v1291 = vadd.f32 %v1051, %v1259
      %v1292 = vadd.f32 %v1052, %v1260
      %v1293 = vadd.f32 %v1053, %v1261
      %v1294 = vadd.f32 %v1054, %v1262
      %v1295 = vadd.f32 %v1055, %v1263
      %v1296 = vadd.f32 %v1056, %v1264
      %v1297 = vadd.f32 %v1057, %v1265
      %v1298 = vadd.f32 %v1058, %v1266
      %v1299 = vadd.f32 %v1059, %v1267
      %v1300 = vld [vmem:[#allocation2 + $0x9] sm:$0xff]
      %v1301 = vld [vmem:[#allocation2 + $0x11] sm:$0xff]
      %v1302 = vld [vmem:[#allocation2 + $0x19] sm:$0xff]
      %v1303 = vld [vmem:[#allocation2 + $0x21] sm:$0xff]
      %v1304 = vld [vmem:[#allocation2 + $0x29] sm:$0xff]
      %v1305 = vld [vmem:[#allocation2 + $0x31] sm:$0xff]
      %v1306 = vld [vmem:[#allocation2 + $0x39] sm:$0xff]
      %v1307 = vld [vmem:[#allocation2 + $0x41] sm:$0xff]
      %v1308 = vld [vmem:[#allocation2 + $0x49] sm:$0xff]
      %v1309 = vld [vmem:[#allocation2 + $0x51] sm:$0xff]
      %v1310 = vld [vmem:[#allocation2 + $0x59] sm:$0xff]
      %v1311 = vld [vmem:[#allocation2 + $0x61] sm:$0xff]
      %v1312 = vld [vmem:[#allocation2 + $0x69] sm:$0xff]
      %v1313 = vld [vmem:[#allocation2 + $0x71] sm:$0xff]
      %v1314 = vld [vmem:[#allocation2 + $0x79] sm:$0xff]
      %v1315 = vld [vmem:[#allocation2 + $0x81] sm:$0xff]
      %v1316 = vld [vmem:[#allocation2 + $0x89] sm:$0xff]
      %v1317 = vld [vmem:[#allocation2 + $0x91] sm:$0xff]
      %v1318 = vld [vmem:[#allocation2 + $0x99] sm:$0xff]
      %v1319 = vld [vmem:[#allocation2 + $0xa1] sm:$0xff]
      %v1320 = vld [vmem:[#allocation2 + $0xa9] sm:$0xff]
      %v1321 = vld [vmem:[#allocation2 + $0xb1] sm:$0xff]
      %v1322 = vld [vmem:[#allocation2 + $0xb9] sm:$0xff]
      %v1323 = vld [vmem:[#allocation2 + $0xc1] sm:$0xff]
      %v1324 = vld [vmem:[#allocation2 + $0xc9] sm:$0xff]
      %v1325 = vld [vmem:[#allocation2 + $0xd1] sm:$0xff]
      %v1326 = vld [vmem:[#allocation2 + $0xd9] sm:$0xff]
      %v1327 = vld [vmem:[#allocation2 + $0xe1] sm:$0xff]
      %v1328 = vld [vmem:[#allocation2 + $0xe9] sm:$0xff]
      %v1329 = vld [vmem:[#allocation2 + $0xf1] sm:$0xff]
      %v1330 = vld [vmem:[#allocation2 + $0xf9] sm:$0xff]
      %v1331 = vld [vmem:[#allocation2 + $0x101] sm:$0xff]
      %v1332 = vlaneseq
      %v1333 = vshrl.u32 %v1332, 7
      %v1334 = vsub.s32 2, %v1333
      %v1335 = vrot.slane %v233, %v1334
      %v1336 = vmul.f32 %v1300, %v1335
      %v1337 = vmul.f32 %v1301, %v1335
      %v1338 = vmul.f32 %v1302, %v1335
      %v1339 = vmul.f32 %v1303, %v1335
      %v1340 = vmul.f32 %v1304, %v1335
      %v1341 = vmul.f32 %v1305, %v1335
      %v1342 = vmul.f32 %v1306, %v1335
      %v1343 = vmul.f32 %v1307, %v1335
      %v1344 = vmul.f32 %v1308, %v1335
      %v1345 = vmul.f32 %v1309, %v1335
      %v1346 = vmul.f32 %v1310, %v1335
      %v1347 = vmul.f32 %v1311, %v1335
      %v1348 = vmul.f32 %v1312, %v1335
      %v1349 = vmul.f32 %v1313, %v1335
      %v1350 = vmul.f32 %v1314, %v1335
      %v1351 = vmul.f32 %v1315, %v1335
      %v1352 = vmul.f32 %v1316, %v1335
      %v1353 = vmul.f32 %v1317, %v1335
      %v1354 = vmul.f32 %v1318, %v1335
      %v1355 = vmul.f32 %v1319, %v1335
      %v1356 = vmul.f32 %v1320, %v1335
      %v1357 = vmul.f32 %v1321, %v1335
      %v1358 = vmul.f32 %v1322, %v1335
      %v1359 = vmul.f32 %v1323, %v1335
      %v1360 = vmul.f32 %v1324, %v1335
      %v1361 = vmul.f32 %v1325, %v1335
      %v1362 = vmul.f32 %v1326, %v1335
      %v1363 = vmul.f32 %v1327, %v1335
      %v1364 = vmul.f32 %v1328, %v1335
      %v1365 = vmul.f32 %v1329, %v1335
      %v1366 = vmul.f32 %v1330, %v1335
      %v1367 = vmul.f32 %v1331, %v1335
      %v1368 = vld [vmem:[#allocation2 + $0x109] sm:$0xff]
      %v1369 = vld [vmem:[#allocation2 + $0x111] sm:$0xff]
      %v1370 = vlaneseq
      %v1371 = vshrl.u32 %v1370, 7
      %v1372 = vsub.s32 5, %v1371
      %v1373 = vrot.slane %v233, %v1372
      %v1374 = vmul.f32 %v1302, %v1373
      %v1375 = vmul.f32 %v1303, %v1373
      %v1376 = vmul.f32 %v1304, %v1373
      %v1377 = vmul.f32 %v1305, %v1373
      %v1378 = vmul.f32 %v1306, %v1373
      %v1379 = vmul.f32 %v1307, %v1373
      %v1380 = vmul.f32 %v1308, %v1373
      %v1381 = vmul.f32 %v1309, %v1373
      %v1382 = vmul.f32 %v1310, %v1373
      %v1383 = vmul.f32 %v1311, %v1373
      %v1384 = vmul.f32 %v1312, %v1373
      %v1385 = vmul.f32 %v1313, %v1373
      %v1386 = vmul.f32 %v1314, %v1373
      %v1387 = vmul.f32 %v1315, %v1373
      %v1388 = vmul.f32 %v1316, %v1373
      %v1389 = vmul.f32 %v1317, %v1373
      %v1390 = vmul.f32 %v1318, %v1373
      %v1391 = vmul.f32 %v1319, %v1373
      %v1392 = vmul.f32 %v1320, %v1373
      %v1393 = vmul.f32 %v1321, %v1373
      %v1394 = vmul.f32 %v1322, %v1373
      %v1395 = vmul.f32 %v1323, %v1373
      %v1396 = vmul.f32 %v1324, %v1373
      %v1397 = vmul.f32 %v1325, %v1373
      %v1398 = vmul.f32 %v1326, %v1373
      %v1399 = vmul.f32 %v1327, %v1373
      %v1400 = vmul.f32 %v1328, %v1373
      %v1401 = vmul.f32 %v1329, %v1373
      %v1402 = vmul.f32 %v1330, %v1373
      %v1403 = vmul.f32 %v1331, %v1373
      %v1404 = vmul.f32 %v1368, %v1373
      %v1405 = vmul.f32 %v1369, %v1373
      %v1406 = vadd.f32 %v1336, %v1374
      %v1407 = vadd.f32 %v1337, %v1375
      %v1408 = vadd.f32 %v1338, %v1376
      %v1409 = vadd.f32 %v1339, %v1377
      %v1410 = vadd.f32 %v1340, %v1378
      %v1411 = vadd.f32 %v1341, %v1379
      %v1412 = vadd.f32 %v1342, %v1380
      %v1413 = vadd.f32 %v1343, %v1381
      %v1414 = vadd.f32 %v1344, %v1382
      %v1415 = vadd.f32 %v1345, %v1383
      %v1416 = vadd.f32 %v1346, %v1384
      %v1417 = vadd.f32 %v1347, %v1385
      %v1418 = vadd.f32 %v1348, %v1386
      %v1419 = vadd.f32 %v1349, %v1387
      %v1420 = vadd.f32 %v1350, %v1388
      %v1421 = vadd.f32 %v1351, %v1389
      %v1422 = vadd.f32 %v1352, %v1390
      %v1423 = vadd.f32 %v1353, %v1391
      %v1424 = vadd.f32 %v1354, %v1392
      %v1425 = vadd.f32 %v1355, %v1393
      %v1426 = vadd.f32 %v1356, %v1394
      %v1427 = vadd.f32 %v1357, %v1395
      %v1428 = vadd.f32 %v1358, %v1396
      %v1429 = vadd.f32 %v1359, %v1397
      %v1430 = vadd.f32 %v1360, %v1398
      %v1431 = vadd.f32 %v1361, %v1399
      %v1432 = vadd.f32 %v1362, %v1400
      %v1433 = vadd.f32 %v1363, %v1401
      %v1434 = vadd.f32 %v1364, %v1402
      %v1435 = vadd.f32 %v1365, %v1403
      %v1436 = vadd.f32 %v1366, %v1404
      %v1437 = vadd.f32 %v1367, %v1405
      %v1438 = vld [vmem:[#allocation2 + $0x119] sm:$0xff]
      %v1439 = vld [vmem:[#allocation2 + $0x121] sm:$0xff]
      %v1440 = vlaneseq
      %v1441 = vshrl.u32 %v1440, 7
      %v1442 = vsub.s32 0, %v1441
      %v1443 = vrot.slane %v234, %v1442
      %v1444 = vmul.f32 %v1304, %v1443
      %v1445 = vmul.f32 %v1305, %v1443
      %v1446 = vmul.f32 %v1306, %v1443
      %v1447 = vmul.f32 %v1307, %v1443
      %v1448 = vmul.f32 %v1308, %v1443
      %v1449 = vmul.f32 %v1309, %v1443
      %v1450 = vmul.f32 %v1310, %v1443
      %v1451 = vmul.f32 %v1311, %v1443
      %v1452 = vmul.f32 %v1312, %v1443
      %v1453 = vmul.f32 %v1313, %v1443
      %v1454 = vmul.f32 %v1314, %v1443
      %v1455 = vmul.f32 %v1315, %v1443
      %v1456 = vmul.f32 %v1316, %v1443
      %v1457 = vmul.f32 %v1317, %v1443
      %v1458 = vmul.f32 %v1318, %v1443
      %v1459 = vmul.f32 %v1319, %v1443
      %v1460 = vmul.f32 %v1320, %v1443
      %v1461 = vmul.f32 %v1321, %v1443
      %v1462 = vmul.f32 %v1322, %v1443
      %v1463 = vmul.f32 %v1323, %v1443
      %v1464 = vmul.f32 %v1324, %v1443
      %v1465 = vmul.f32 %v1325, %v1443
      %v1466 = vmul.f32 %v1326, %v1443
      %v1467 = vmul.f32 %v1327, %v1443
      %v1468 = vmul.f32 %v1328, %v1443
      %v1469 = vmul.f32 %v1329, %v1443
      %v1470 = vmul.f32 %v1330, %v1443
      %v1471 = vmul.f32 %v1331, %v1443
      %v1472 = vmul.f32 %v1368, %v1443
      %v1473 = vmul.f32 %v1369, %v1443
      %v1474 = vmul.f32 %v1438, %v1443
      %v1475 = vmul.f32 %v1439, %v1443
      %v1476 = vadd.f32 %v1406, %v1444
      %v1477 = vadd.f32 %v1407, %v1445
      %v1478 = vadd.f32 %v1408, %v1446
      %v1479 = vadd.f32 %v1409, %v1447
      %v1480 = vadd.f32 %v1410, %v1448
      %v1481 = vadd.f32 %v1411, %v1449
      %v1482 = vadd.f32 %v1412, %v1450
      %v1483 = vadd.f32 %v1413, %v1451
      %v1484 = vadd.f32 %v1414, %v1452
      %v1485 = vadd.f32 %v1415, %v1453
      %v1486 = vadd.f32 %v1416, %v1454
      %v1487 = vadd.f32 %v1417, %v1455
      %v1488 = vadd.f32 %v1418, %v1456
      %v1489 = vadd.f32 %v1419, %v1457
      %v1490 = vadd.f32 %v1420, %v1458
      %v1491 = vadd.f32 %v1421, %v1459
      %v1492 = vadd.f32 %v1422, %v1460
      %v1493 = vadd.f32 %v1423, %v1461
      %v1494 = vadd.f32 %v1424, %v1462
      %v1495 = vadd.f32 %v1425, %v1463
      %v1496 = vadd.f32 %v1426, %v1464
      %v1497 = vadd.f32 %v1427, %v1465
      %v1498 = vadd.f32 %v1428, %v1466
      %v1499 = vadd.f32 %v1429, %v1467
      %v1500 = vadd.f32 %v1430, %v1468
      %v1501 = vadd.f32 %v1431, %v1469
      %v1502 = vadd.f32 %v1432, %v1470
      %v1503 = vadd.f32 %v1433, %v1471
      %v1504 = vadd.f32 %v1434, %v1472
      %v1505 = vadd.f32 %v1435, %v1473
      %v1506 = vadd.f32 %v1436, %v1474
      %v1507 = vadd.f32 %v1437, %v1475
      %vm1508 = vcmp.eq.s32.totalorder %v692, 15
      %vm1509 = vcmp.eq.s32.totalorder %v693, 15
      %vm1510 = vcmp.eq.s32.totalorder %v694, 15
      %vm1511 = vcmp.eq.s32.totalorder %v695, 15
      %vm1512 = vcmp.eq.s32.totalorder %v696, 15
      %vm1513 = vcmp.eq.s32.totalorder %v697, 15
      %vm1514 = vcmp.eq.s32.totalorder %v698, 15
      %vm1515 = vcmp.eq.s32.totalorder %v699, 15
      %vm1516 = vcmp.eq.s32.totalorder %v700, 15
      %vm1517 = vcmp.eq.s32.totalorder %v701, 15
      %vm1518 = vcmp.eq.s32.totalorder %v702, 15
      %vm1519 = vcmp.eq.s32.totalorder %v703, 15
      %vm1520 = vcmp.eq.s32.totalorder %v704, 15
      %vm1521 = vcmp.eq.s32.totalorder %v705, 15
      %vm1522 = vcmp.eq.s32.totalorder %v706, 15
      %vm1523 = vcmp.eq.s32.totalorder %v707, 15
      %vm1524 = vcmp.eq.s32.totalorder %v708, 15
      %vm1525 = vcmp.eq.s32.totalorder %v709, 15
      %vm1526 = vcmp.eq.s32.totalorder %v710, 15
      %vm1527 = vcmp.eq.s32.totalorder %v711, 15
      %vm1528 = vcmp.eq.s32.totalorder %v712, 15
      %vm1529 = vcmp.eq.s32.totalorder %v713, 15
      %vm1530 = vcmp.eq.s32.totalorder %v714, 15
      %vm1531 = vcmp.eq.s32.totalorder %v715, 15
      %vm1532 = vcmp.eq.s32.totalorder %v716, 15
      %vm1533 = vcmp.eq.s32.totalorder %v717, 15
      %vm1534 = vcmp.eq.s32.totalorder %v718, 15
      %vm1535 = vcmp.eq.s32.totalorder %v719, 15
      %vm1536 = vcmp.eq.s32.totalorder %v720, 15
      %vm1537 = vcmp.eq.s32.totalorder %v721, 15
      %vm1538 = vcmp.eq.s32.totalorder %v722, 15
      %vm1539 = vcmp.eq.s32.totalorder %v723, 15
      %v1540 = vsel %vm1508, 1, 0
      %v1541 = vsel %vm1509, 1, 0
      %v1542 = vsel %vm1510, 1, 0
      %v1543 = vsel %vm1511, 1, 0
      %v1544 = vsel %vm1512, 1, 0
      %v1545 = vsel %vm1513, 1, 0
      %v1546 = vsel %vm1514, 1, 0
      %v1547 = vsel %vm1515, 1, 0
      %v1548 = vsel %vm1516, 1, 0
      %v1549 = vsel %vm1517, 1, 0
      %v1550 = vsel %vm1518, 1, 0
      %v1551 = vsel %vm1519, 1, 0
      %v1552 = vsel %vm1520, 1, 0
      %v1553 = vsel %vm1521, 1, 0
      %v1554 = vsel %vm1522, 1, 0
      %v1555 = vsel %vm1523, 1, 0
      %v1556 = vsel %vm1524, 1, 0
      %v1557 = vsel %vm1525, 1, 0
      %v1558 = vsel %vm1526, 1, 0
      %v1559 = vsel %vm1527, 1, 0
      %v1560 = vsel %vm1528, 1, 0
      %v1561 = vsel %vm1529, 1, 0
      %v1562 = vsel %vm1530, 1, 0
      %v1563 = vsel %vm1531, 1, 0
      %v1564 = vsel %vm1532, 1, 0
      %v1565 = vsel %vm1533, 1, 0
      %v1566 = vsel %vm1534, 1, 0
      %v1567 = vsel %vm1535, 1, 0
      %v1568 = vsel %vm1536, 1, 0
      %v1569 = vsel %vm1537, 1, 0
      %v1570 = vsel %vm1538, 1, 0
      %v1571 = vsel %vm1539, 1, 0
      %vm1572 = vcmp.eq.s32.totalorder %v1540, 1
      %vm1573 = vcmp.eq.s32.totalorder %v1541, 1
      %vm1574 = vcmp.eq.s32.totalorder %v1542, 1
      %vm1575 = vcmp.eq.s32.totalorder %v1543, 1
      %vm1576 = vcmp.eq.s32.totalorder %v1544, 1
      %vm1577 = vcmp.eq.s32.totalorder %v1545, 1
      %vm1578 = vcmp.eq.s32.totalorder %v1546, 1
      %vm1579 = vcmp.eq.s32.totalorder %v1547, 1
      %vm1580 = vcmp.eq.s32.totalorder %v1548, 1
      %vm1581 = vcmp.eq.s32.totalorder %v1549, 1
      %vm1582 = vcmp.eq.s32.totalorder %v1550, 1
      %vm1583 = vcmp.eq.s32.totalorder %v1551, 1
      %vm1584 = vcmp.eq.s32.totalorder %v1552, 1
      %vm1585 = vcmp.eq.s32.totalorder %v1553, 1
      %vm1586 = vcmp.eq.s32.totalorder %v1554, 1
      %vm1587 = vcmp.eq.s32.totalorder %v1555, 1
      %vm1588 = vcmp.eq.s32.totalorder %v1556, 1
      %vm1589 = vcmp.eq.s32.totalorder %v1557, 1
      %vm1590 = vcmp.eq.s32.totalorder %v1558, 1
      %vm1591 = vcmp.eq.s32.totalorder %v1559, 1
      %vm1592 = vcmp.eq.s32.totalorder %v1560, 1
      %vm1593 = vcmp.eq.s32.totalorder %v1561, 1
      %vm1594 = vcmp.eq.s32.totalorder %v1562, 1
      %vm1595 = vcmp.eq.s32.totalorder %v1563, 1
      %vm1596 = vcmp.eq.s32.totalorder %v1564, 1
      %vm1597 = vcmp.eq.s32.totalorder %v1565, 1
      %vm1598 = vcmp.eq.s32.totalorder %v1566, 1
      %vm1599 = vcmp.eq.s32.totalorder %v1567, 1
      %vm1600 = vcmp.eq.s32.totalorder %v1568, 1
      %vm1601 = vcmp.eq.s32.totalorder %v1569, 1
      %vm1602 = vcmp.eq.s32.totalorder %v1570, 1
      %vm1603 = vcmp.eq.s32.totalorder %v1571, 1
      %v1604 = vsel %vm1572, 0.0, %v1476
      %v1605 = vsel %vm1573, 0.0, %v1477
      %v1606 = vsel %vm1574, 0.0, %v1478
      %v1607 = vsel %vm1575, 0.0, %v1479
      %v1608 = vsel %vm1576, 0.0, %v1480
      %v1609 = vsel %vm1577, 0.0, %v1481
      %v1610 = vsel %vm1578, 0.0, %v1482
      %v1611 = vsel %vm1579, 0.0, %v1483
      %v1612 = vsel %vm1580, 0.0, %v1484
      %v1613 = vsel %vm1581, 0.0, %v1485
      %v1614 = vsel %vm1582, 0.0, %v1486
      %v1615 = vsel %vm1583, 0.0, %v1487
      %v1616 = vsel %vm1584, 0.0, %v1488
      %v1617 = vsel %vm1585, 0.0, %v1489
      %v1618 = vsel %vm1586, 0.0, %v1490
      %v1619 = vsel %vm1587, 0.0, %v1491
      %v1620 = vsel %vm1588, 0.0, %v1492
      %v1621 = vsel %vm1589, 0.0, %v1493
      %v1622 = vsel %vm1590, 0.0, %v1494
      %v1623 = vsel %vm1591, 0.0, %v1495
      %v1624 = vsel %vm1592, 0.0, %v1496
      %v1625 = vsel %vm1593, 0.0, %v1497
      %v1626 = vsel %vm1594, 0.0, %v1498
      %v1627 = vsel %vm1595, 0.0, %v1499
      %v1628 = vsel %vm1596, 0.0, %v1500
      %v1629 = vsel %vm1597, 0.0, %v1501
      %v1630 = vsel %vm1598, 0.0, %v1502
      %v1631 = vsel %vm1599, 0.0, %v1503
      %v1632 = vsel %vm1600, 0.0, %v1504
      %v1633 = vsel %vm1601, 0.0, %v1505
      %v1634 = vsel %vm1602, 0.0, %v1506
      %v1635 = vsel %vm1603, 0.0, %v1507
      %v1636 = vadd.f32 %v1268, %v1604
      %v1637 = vadd.f32 %v1269, %v1605
      %v1638 = vadd.f32 %v1270, %v1606
      %v1639 = vadd.f32 %v1271, %v1607
      %v1640 = vadd.f32 %v1272, %v1608
      %v1641 = vadd.f32 %v1273, %v1609
      %v1642 = vadd.f32 %v1274, %v1610
      %v1643 = vadd.f32 %v1275, %v1611
      %v1644 = vadd.f32 %v1276, %v1612
      %v1645 = vadd.f32 %v1277, %v1613
      %v1646 = vadd.f32 %v1278, %v1614
      %v1647 = vadd.f32 %v1279, %v1615
      %v1648 = vadd.f32 %v1280, %v1616
      %v1649 = vadd.f32 %v1281, %v1617
      %v1650 = vadd.f32 %v1282, %v1618
      %v1651 = vadd.f32 %v1283, %v1619
      %v1652 = vadd.f32 %v1284, %v1620
      %v1653 = vadd.f32 %v1285, %v1621
      %v1654 = vadd.f32 %v1286, %v1622
      %v1655 = vadd.f32 %v1287, %v1623
      %v1656 = vadd.f32 %v1288, %v1624
      %v1657 = vadd.f32 %v1289, %v1625
      %v1658 = vadd.f32 %v1290, %v1626
      %v1659 = vadd.f32 %v1291, %v1627
      %v1660 = vadd.f32 %v1292, %v1628
      %v1661 = vadd.f32 %v1293, %v1629
      %v1662 = vadd.f32 %v1294, %v1630
      %v1663 = vadd.f32 %v1295, %v1631
      %v1664 = vadd.f32 %v1296, %v1632
      %v1665 = vadd.f32 %v1297, %v1633
      %v1666 = vadd.f32 %v1298, %v1634
      %v1667 = vadd.f32 %v1299, %v1635
      %v1669 = vlaneseq
      %v1670 = vshrl.u32 %v1669, 7
      %v1671 = vsub.s32 0, %v1670
      %v1672 = vrot.slane %v235, %v1671
      %v1674 = vadd.f32 %v1636, %v1672
      %v1675 = vadd.f32 %v1637, %v1672
      %v1676 = vadd.f32 %v1638, %v1672
      %v1677 = vadd.f32 %v1639, %v1672
      %v1678 = vadd.f32 %v1640, %v1672
      %v1679 = vadd.f32 %v1641, %v1672
      %v1680 = vadd.f32 %v1642, %v1672
      %v1681 = vadd.f32 %v1643, %v1672
      %v1682 = vadd.f32 %v1644, %v1672
      %v1683 = vadd.f32 %v1645, %v1672
      %v1684 = vadd.f32 %v1646, %v1672
      %v1685 = vadd.f32 %v1647, %v1672
      %v1686 = vadd.f32 %v1648, %v1672
      %v1687 = vadd.f32 %v1649, %v1672
      %v1688 = vadd.f32 %v1650, %v1672
      %v1689 = vadd.f32 %v1651, %v1672
      %v1690 = vadd.f32 %v1652, %v1672
      %v1691 = vadd.f32 %v1653, %v1672
      %v1692 = vadd.f32 %v1654, %v1672
      %v1693 = vadd.f32 %v1655, %v1672
      %v1694 = vadd.f32 %v1656, %v1672
      %v1695 = vadd.f32 %v1657, %v1672
      %v1696 = vadd.f32 %v1658, %v1672
      %v1697 = vadd.f32 %v1659, %v1672
      %v1698 = vadd.f32 %v1660, %v1672
      %v1699 = vadd.f32 %v1661, %v1672
      %v1700 = vadd.f32 %v1662, %v1672
      %v1701 = vadd.f32 %v1663, %v1672
      %v1702 = vadd.f32 %v1664, %v1672
      %v1703 = vadd.f32 %v1665, %v1672
      %v1704 = vadd.f32 %v1666, %v1672
      %v1705 = vadd.f32 %v1667, %v1672
      %1706 = vst.msk [vmem:[%s232] sm:$0xff] %vm236, %v1674
      %1707 = vst.msk [vmem:[%s232 + $0x8] sm:$0xff] %vm236, %v1675
      %1708 = vst.msk [vmem:[%s232 + $0x10] sm:$0xff] %vm236, %v1676
      %1709 = vst.msk [vmem:[%s232 + $0x18] sm:$0xff] %vm236, %v1677
      %1710 = vst.msk [vmem:[%s232 + $0x20] sm:$0xff] %vm236, %v1678
      %1711 = vst.msk [vmem:[%s232 + $0x28] sm:$0xff] %vm236, %v1679
      %1712 = vst.msk [vmem:[%s232 + $0x30] sm:$0xff] %vm236, %v1680
      %1713 = vst.msk [vmem:[%s232 + $0x38] sm:$0xff] %vm236, %v1681
      %1714 = vst.msk [vmem:[%s232 + $0x40] sm:$0xff] %vm236, %v1682
      %1715 = vst.msk [vmem:[%s232 + $0x48] sm:$0xff] %vm236, %v1683
      %1716 = vst.msk [vmem:[%s232 + $0x50] sm:$0xff] %vm236, %v1684
      %1717 = vst.msk [vmem:[%s232 + $0x58] sm:$0xff] %vm236, %v1685
      %1718 = vst.msk [vmem:[%s232 + $0x60] sm:$0xff] %vm236, %v1686
      %1719 = vst.msk [vmem:[%s232 + $0x68] sm:$0xff] %vm236, %v1687
      %1720 = vst.msk [vmem:[%s232 + $0x70] sm:$0xff] %vm236, %v1688
      %1721 = vst.msk [vmem:[%s232 + $0x78] sm:$0xff] %vm236, %v1689
      %1722 = vst.msk [vmem:[%s232 + $0x80] sm:$0xff] %vm236, %v1690
      %1723 = vst.msk [vmem:[%s232 + $0x88] sm:$0xff] %vm236, %v1691
      %1724 = vst.msk [vmem:[%s232 + $0x90] sm:$0xff] %vm236, %v1692
      %1725 = vst.msk [vmem:[%s232 + $0x98] sm:$0xff] %vm236, %v1693
      %1726 = vst.msk [vmem:[%s232 + $0xa0] sm:$0xff] %vm236, %v1694
      %1727 = vst.msk [vmem:[%s232 + $0xa8] sm:$0xff] %vm236, %v1695
      %1728 = vst.msk [vmem:[%s232 + $0xb0] sm:$0xff] %vm236, %v1696
      %1729 = vst.msk [vmem:[%s232 + $0xb8] sm:$0xff] %vm236, %v1697
      %1730 = vst.msk [vmem:[%s232 + $0xc0] sm:$0xff] %vm236, %v1698
      %1731 = vst.msk [vmem:[%s232 + $0xc8] sm:$0xff] %vm236, %v1699
      %1732 = vst.msk [vmem:[%s232 + $0xd0] sm:$0xff] %vm236, %v1700
      %1733 = vst.msk [vmem:[%s232 + $0xd8] sm:$0xff] %vm236, %v1701
      %1734 = vst.msk [vmem:[%s232 + $0xe0] sm:$0xff] %vm236, %v1702
      %1735 = vst.msk [vmem:[%s232 + $0xe8] sm:$0xff] %vm236, %v1703
      %1736 = vst.msk [vmem:[%s232 + $0xf0] sm:$0xff] %vm236, %v1704
      %1737 = vst.msk [vmem:[%s232 + $0xf8] sm:$0xff] %vm236, %v1705
      %1738 = vst.msk [vmem:[#allocation3] sm:$0xff] %vm236, 0.0
      %1739 = vst.msk [vmem:[#allocation3 + $0x8] sm:$0xff] %vm236, 0.0
      %1740 = vst.msk [vmem:[#allocation3 + $0x50] sm:$0xff] %vm236, 0.0
      %1741 = vst.msk [vmem:[#allocation3 + $0x58] sm:$0xff] %vm236, 0.0
      %v1742 = vld [vmem:[%s217 + $0x100] sm:$0xff]
      %v1743 = vld [vmem:[%s217 + $0x108] sm:$0xff]
      %v1744 = vld [vmem:[%s217 + $0x110] sm:$0xff]
      %v1745 = vld [vmem:[%s217 + $0x118] sm:$0xff]
      %v1746 = vld [vmem:[%s217 + $0x120] sm:$0xff]
      %v1747 = vld [vmem:[%s217 + $0x128] sm:$0xff]
      %v1748 = vld [vmem:[%s217 + $0x130] sm:$0xff]
      %v1749 = vld [vmem:[%s217 + $0x138] sm:$0xff]
      %1750 = vst.msk [vmem:[#allocation3 + $0x10] sm:$0xff] %vm236, %v1742
      %1751 = vst.msk [vmem:[#allocation3 + $0x18] sm:$0xff] %vm236, %v1743
      %1752 = vst.msk [vmem:[#allocation3 + $0x20] sm:$0xff] %vm236, %v1744
      %1753 = vst.msk [vmem:[#allocation3 + $0x28] sm:$0xff] %vm236, %v1745
      %1754 = vst.msk [vmem:[#allocation3 + $0x30] sm:$0xff] %vm236, %v1746
      %1755 = vst.msk [vmem:[#allocation3 + $0x38] sm:$0xff] %vm236, %v1747
      %1756 = vst.msk [vmem:[#allocation3 + $0x40] sm:$0xff] %vm236, %v1748
      %1757 = vst.msk [vmem:[#allocation3 + $0x48] sm:$0xff] %vm236, %v1749
      %vm1758 = vcmp.lt.s32.totalorder %v308, 0
      %v1759 = vsub.s32 0, %v308
      %v1760 = vsel %vm1758, %v1759, %v308
      %v1761 = vshrl.u32 %v1760, 3
      %v1762 = vand.u32 %v1760, 7
      %v1763 = vsub.s32 0, %v1762
      %v1764 = vsel %vm1758, %v1763, %v1762
      %vm1765 = vcmp.lt.s32.totalorder %v309, 0
      %v1766 = vsub.s32 0, %v309
      %v1767 = vsel %vm1765, %v1766, %v309
      %v1768 = vshrl.u32 %v1767, 3
      %v1769 = vand.u32 %v1767, 7
      %v1770 = vsub.s32 0, %v1769
      %v1771 = vsel %vm1765, %v1770, %v1769
      %vm1772 = vcmp.lt.s32.totalorder %v310, 0
      %v1773 = vsub.s32 0, %v310
      %v1774 = vsel %vm1772, %v1773, %v310
      %v1775 = vshrl.u32 %v1774, 3
      %v1776 = vand.u32 %v1774, 7
      %v1777 = vsub.s32 0, %v1776
      %v1778 = vsel %vm1772, %v1777, %v1776
      %vm1779 = vcmp.lt.s32.totalorder %v311, 0
      %v1780 = vsub.s32 0, %v311
      %v1781 = vsel %vm1779, %v1780, %v311
      %v1782 = vshrl.u32 %v1781, 3
      %v1783 = vand.u32 %v1781, 7
      %v1784 = vsub.s32 0, %v1783
      %v1785 = vsel %vm1779, %v1784, %v1783
      %vm1786 = vcmp.lt.s32.totalorder %v312, 0
      %v1787 = vsub.s32 0, %v312
      %v1788 = vsel %vm1786, %v1787, %v312
      %v1789 = vshrl.u32 %v1788, 3
      %v1790 = vand.u32 %v1788, 7
      %v1791 = vsub.s32 0, %v1790
      %v1792 = vsel %vm1786, %v1791, %v1790
      %vm1793 = vcmp.lt.s32.totalorder %v313, 0
      %v1794 = vsub.s32 0, %v313
      %v1795 = vsel %vm1793, %v1794, %v313
      %v1796 = vshrl.u32 %v1795, 3
      %v1797 = vand.u32 %v1795, 7
      %v1798 = vsub.s32 0, %v1797
      %v1799 = vsel %vm1793, %v1798, %v1797
      %vm1800 = vcmp.lt.s32.totalorder %v314, 0
      %v1801 = vsub.s32 0, %v314
      %v1802 = vsel %vm1800, %v1801, %v314
      %v1803 = vshrl.u32 %v1802, 3
      %v1804 = vand.u32 %v1802, 7
      %v1805 = vsub.s32 0, %v1804
      %v1806 = vsel %vm1800, %v1805, %v1804
      %vm1807 = vcmp.lt.s32.totalorder %v315, 0
      %v1808 = vsub.s32 0, %v315
      %v1809 = vsel %vm1807, %v1808, %v315
      %v1810 = vshrl.u32 %v1809, 3
      %v1811 = vand.u32 %v1809, 7
      %v1812 = vsub.s32 0, %v1811
      %v1813 = vsel %vm1807, %v1812, %v1811
      %vm1814 = vcmp.ne.s32.totalorder %v1764, 0
      %vm1815 = vcmp.ne.s32.totalorder %v1771, 0
      %vm1816 = vcmp.ne.s32.totalorder %v1778, 0
      %vm1817 = vcmp.ne.s32.totalorder %v1785, 0
      %vm1818 = vcmp.ne.s32.totalorder %v1792, 0
      %vm1819 = vcmp.ne.s32.totalorder %v1799, 0
      %vm1820 = vcmp.ne.s32.totalorder %v1806, 0
      %vm1821 = vcmp.ne.s32.totalorder %v1813, 0
      %vm1822 = vcmp.lt.s32.totalorder %v1764, 0
      %vm1823 = vcmp.lt.s32.totalorder %v1771, 0
      %vm1824 = vcmp.lt.s32.totalorder %v1778, 0
      %vm1825 = vcmp.lt.s32.totalorder %v1785, 0
      %vm1826 = vcmp.lt.s32.totalorder %v1792, 0
      %vm1827 = vcmp.lt.s32.totalorder %v1799, 0
      %vm1828 = vcmp.lt.s32.totalorder %v1806, 0
      %vm1829 = vcmp.lt.s32.totalorder %v1813, 0
      %vm1830 = vmand %vm1822, %vm1814
      %vm1831 = vmand %vm1823, %vm1815
      %vm1832 = vmand %vm1824, %vm1816
      %vm1833 = vmand %vm1825, %vm1817
      %vm1834 = vmand %vm1826, %vm1818
      %vm1835 = vmand %vm1827, %vm1819
      %vm1836 = vmand %vm1828, %vm1820
      %vm1837 = vmand %vm1829, %vm1821
      %v1838 = vadd.s32 %v1764, 8
      %v1839 = vadd.s32 %v1771, 8
      %v1840 = vadd.s32 %v1778, 8
      %v1841 = vadd.s32 %v1785, 8
      %v1842 = vadd.s32 %v1792, 8
      %v1843 = vadd.s32 %v1799, 8
      %v1844 = vadd.s32 %v1806, 8
      %v1845 = vadd.s32 %v1813, 8
      %v1846 = vsel %vm1830, %v1838, %v1764
      %v1847 = vsel %vm1831, %v1839, %v1771
      %v1848 = vsel %vm1832, %v1840, %v1778
      %v1849 = vsel %vm1833, %v1841, %v1785
      %v1850 = vsel %vm1834, %v1842, %v1792
      %v1851 = vsel %vm1835, %v1843, %v1799
      %v1852 = vsel %vm1836, %v1844, %v1806
      %v1853 = vsel %vm1837, %v1845, %v1813
      %v1854 = vld [vmem:[#allocation3 + $0x7] sm:$0xff]
      %v1855 = vld [vmem:[#allocation3 + $0xf] sm:$0xff]
      %v1856 = vld [vmem:[#allocation3 + $0x17] sm:$0xff]
      %v1857 = vld [vmem:[#allocation3 + $0x1f] sm:$0xff]
      %v1858 = vld [vmem:[#allocation3 + $0x27] sm:$0xff]
      %v1859 = vld [vmem:[#allocation3 + $0x2f] sm:$0xff]
      %v1860 = vld [vmem:[#allocation3 + $0x37] sm:$0xff]
      %v1861 = vld [vmem:[#allocation3 + $0x3f] sm:$0xff]
      %v1862 = vmul.f32 %v1854, %v759
      %v1863 = vmul.f32 %v1855, %v759
      %v1864 = vmul.f32 %v1856, %v759
      %v1865 = vmul.f32 %v1857, %v759
      %v1866 = vmul.f32 %v1858, %v759
      %v1867 = vmul.f32 %v1859, %v759
      %v1868 = vmul.f32 %v1860, %v759
      %v1869 = vmul.f32 %v1861, %v759
      %v1870 = vld [vmem:[#allocation3 + $0x47] sm:$0xff]
      %v1871 = vmul.f32 %v1855, %v797
      %v1872 = vmul.f32 %v1856, %v797
      %v1873 = vmul.f32 %v1857, %v797
      %v1874 = vmul.f32 %v1858, %v797
      %v1875 = vmul.f32 %v1859, %v797
      %v1876 = vmul.f32 %v1860, %v797
      %v1877 = vmul.f32 %v1861, %v797
      %v1878 = vmul.f32 %v1870, %v797
      %v1879 = vadd.f32 %v1862, %v1871
      %v1880 = vadd.f32 %v1863, %v1872
      %v1881 = vadd.f32 %v1864, %v1873
      %v1882 = vadd.f32 %v1865, %v1874
      %v1883 = vadd.f32 %v1866, %v1875
      %v1884 = vadd.f32 %v1867, %v1876
      %v1885 = vadd.f32 %v1868, %v1877
      %v1886 = vadd.f32 %v1869, %v1878
      %v1887 = vld [vmem:[#allocation3 + $0x4f] sm:$0xff]
      %v1888 = vmul.f32 %v1856, %v867
      %v1889 = vmul.f32 %v1857, %v867
      %v1890 = vmul.f32 %v1858, %v867
      %v1891 = vmul.f32 %v1859, %v867
      %v1892 = vmul.f32 %v1860, %v867
      %v1893 = vmul.f32 %v1861, %v867
      %v1894 = vmul.f32 %v1870, %v867
      %v1895 = vmul.f32 %v1887, %v867
      %v1896 = vadd.f32 %v1879, %v1888
      %v1897 = vadd.f32 %v1880, %v1889
      %v1898 = vadd.f32 %v1881, %v1890
      %v1899 = vadd.f32 %v1882, %v1891
      %v1900 = vadd.f32 %v1883, %v1892
      %v1901 = vadd.f32 %v1884, %v1893
      %v1902 = vadd.f32 %v1885, %v1894
      %v1903 = vadd.f32 %v1886, %v1895
      %vm1904 = vcmp.eq.s32.totalorder %v1846, 0
      %vm1905 = vcmp.eq.s32.totalorder %v1847, 0
      %vm1906 = vcmp.eq.s32.totalorder %v1848, 0
      %vm1907 = vcmp.eq.s32.totalorder %v1849, 0
      %vm1908 = vcmp.eq.s32.totalorder %v1850, 0
      %vm1909 = vcmp.eq.s32.totalorder %v1851, 0
      %vm1910 = vcmp.eq.s32.totalorder %v1852, 0
      %vm1911 = vcmp.eq.s32.totalorder %v1853, 0
      %v1912 = vsel %vm1904, 1, 0
      %v1913 = vsel %vm1905, 1, 0
      %v1914 = vsel %vm1906, 1, 0
      %v1915 = vsel %vm1907, 1, 0
      %v1916 = vsel %vm1908, 1, 0
      %v1917 = vsel %vm1909, 1, 0
      %v1918 = vsel %vm1910, 1, 0
      %v1919 = vsel %vm1911, 1, 0
      %vm1920 = vcmp.eq.s32.totalorder %v1912, 1
      %vm1921 = vcmp.eq.s32.totalorder %v1913, 1
      %vm1922 = vcmp.eq.s32.totalorder %v1914, 1
      %vm1923 = vcmp.eq.s32.totalorder %v1915, 1
      %vm1924 = vcmp.eq.s32.totalorder %v1916, 1
      %vm1925 = vcmp.eq.s32.totalorder %v1917, 1
      %vm1926 = vcmp.eq.s32.totalorder %v1918, 1
      %vm1927 = vcmp.eq.s32.totalorder %v1919, 1
      %v1928 = vsel %vm1920, 0.0, %v1896
      %v1929 = vsel %vm1921, 0.0, %v1897
      %v1930 = vsel %vm1922, 0.0, %v1898
      %v1931 = vsel %vm1923, 0.0, %v1899
      %v1932 = vsel %vm1924, 0.0, %v1900
      %v1933 = vsel %vm1925, 0.0, %v1901
      %v1934 = vsel %vm1926, 0.0, %v1902
      %v1935 = vsel %vm1927, 0.0, %v1903
      %v1936 = vld [vmem:[#allocation3 + $0x8] sm:$0xff]
      %v1937 = vld [vmem:[#allocation3 + $0x10] sm:$0xff]
      %v1938 = vld [vmem:[#allocation3 + $0x18] sm:$0xff]
      %v1939 = vld [vmem:[#allocation3 + $0x20] sm:$0xff]
      %v1940 = vld [vmem:[#allocation3 + $0x28] sm:$0xff]
      %v1941 = vld [vmem:[#allocation3 + $0x30] sm:$0xff]
      %v1942 = vld [vmem:[#allocation3 + $0x38] sm:$0xff]
      %v1943 = vld [vmem:[#allocation3 + $0x40] sm:$0xff]
      %v1944 = vmul.f32 %v1936, %v1095
      %v1945 = vmul.f32 %v1937, %v1095
      %v1946 = vmul.f32 %v1938, %v1095
      %v1947 = vmul.f32 %v1939, %v1095
      %v1948 = vmul.f32 %v1940, %v1095
      %v1949 = vmul.f32 %v1941, %v1095
      %v1950 = vmul.f32 %v1942, %v1095
      %v1951 = vmul.f32 %v1943, %v1095
      %v1952 = vld [vmem:[#allocation3 + $0x48] sm:$0xff]
      %v1953 = vmul.f32 %v1937, %v1133
      %v1954 = vmul.f32 %v1938, %v1133
      %v1955 = vmul.f32 %v1939, %v1133
      %v1956 = vmul.f32 %v1940, %v1133
      %v1957 = vmul.f32 %v1941, %v1133
      %v1958 = vmul.f32 %v1942, %v1133
      %v1959 = vmul.f32 %v1943, %v1133
      %v1960 = vmul.f32 %v1952, %v1133
      %v1961 = vadd.f32 %v1944, %v1953
      %v1962 = vadd.f32 %v1945, %v1954
      %v1963 = vadd.f32 %v1946, %v1955
      %v1964 = vadd.f32 %v1947, %v1956
      %v1965 = vadd.f32 %v1948, %v1957
      %v1966 = vadd.f32 %v1949, %v1958
      %v1967 = vadd.f32 %v1950, %v1959
      %v1968 = vadd.f32 %v1951, %v1960
      %v1969 = vld [vmem:[#allocation3 + $0x50] sm:$0xff]
      %v1970 = vmul.f32 %v1938, %v1203
      %v1971 = vmul.f32 %v1939, %v1203
      %v1972 = vmul.f32 %v1940, %v1203
      %v1973 = vmul.f32 %v1941, %v1203
      %v1974 = vmul.f32 %v1942, %v1203
      %v1975 = vmul.f32 %v1943, %v1203
      %v1976 = vmul.f32 %v1952, %v1203
      %v1977 = vmul.f32 %v1969, %v1203
      %v1978 = vadd.f32 %v1961, %v1970
      %v1979 = vadd.f32 %v1962, %v1971
      %v1980 = vadd.f32 %v1963, %v1972
      %v1981 = vadd.f32 %v1964, %v1973
      %v1982 = vadd.f32 %v1965, %v1974
      %v1983 = vadd.f32 %v1966, %v1975
      %v1984 = vadd.f32 %v1967, %v1976
      %v1985 = vadd.f32 %v1968, %v1977
      %v1986 = vadd.f32 %v1928, %v1978
      %v1987 = vadd.f32 %v1929, %v1979
      %v1988 = vadd.f32 %v1930, %v1980
      %v1989 = vadd.f32 %v1931, %v1981
      %v1990 = vadd.f32 %v1932, %v1982
      %v1991 = vadd.f32 %v1933, %v1983
      %v1992 = vadd.f32 %v1934, %v1984
      %v1993 = vadd.f32 %v1935, %v1985
      %v1994 = vld [vmem:[#allocation3 + $0x9] sm:$0xff]
      %v1995 = vld [vmem:[#allocation3 + $0x11] sm:$0xff]
      %v1996 = vld [vmem:[#allocation3 + $0x19] sm:$0xff]
      %v1997 = vld [vmem:[#allocation3 + $0x21] sm:$0xff]
      %v1998 = vld [vmem:[#allocation3 + $0x29] sm:$0xff]
      %v1999 = vld [vmem:[#allocation3 + $0x31] sm:$0xff]
      %v2000 = vld [vmem:[#allocation3 + $0x39] sm:$0xff]
      %v2001 = vld [vmem:[#allocation3 + $0x41] sm:$0xff]
      %v2002 = vmul.f32 %v1994, %v1335
      %v2003 = vmul.f32 %v1995, %v1335
      %v2004 = vmul.f32 %v1996, %v1335
      %v2005 = vmul.f32 %v1997, %v1335
      %v2006 = vmul.f32 %v1998, %v1335
      %v2007 = vmul.f32 %v1999, %v1335
      %v2008 = vmul.f32 %v2000, %v1335
      %v2009 = vmul.f32 %v2001, %v1335
      %v2010 = vld [vmem:[#allocation3 + $0x49] sm:$0xff]
      %v2011 = vmul.f32 %v1995, %v1373
      %v2012 = vmul.f32 %v1996, %v1373
      %v2013 = vmul.f32 %v1997, %v1373
      %v2014 = vmul.f32 %v1998, %v1373
      %v2015 = vmul.f32 %v1999, %v1373
      %v2016 = vmul.f32 %v2000, %v1373
      %v2017 = vmul.f32 %v2001, %v1373
      %v2018 = vmul.f32 %v2010, %v1373
      %v2019 = vadd.f32 %v2002, %v2011
      %v2020 = vadd.f32 %v2003, %v2012
      %v2021 = vadd.f32 %v2004, %v2013
      %v2022 = vadd.f32 %v2005, %v2014
      %v2023 = vadd.f32 %v2006, %v2015
      %v2024 = vadd.f32 %v2007, %v2016
      %v2025 = vadd.f32 %v2008, %v2017
      %v2026 = vadd.f32 %v2009, %v2018
      %v2027 = vld [vmem:[#allocation3 + $0x51] sm:$0xff]
      %v2028 = vmul.f32 %v1996, %v1443
      %v2029 = vmul.f32 %v1997, %v1443
      %v2030 = vmul.f32 %v1998, %v1443
      %v2031 = vmul.f32 %v1999, %v1443
      %v2032 = vmul.f32 %v2000, %v1443
      %v2033 = vmul.f32 %v2001, %v1443
      %v2034 = vmul.f32 %v2010, %v1443
      %v2035 = vmul.f32 %v2027, %v1443
      %v2036 = vadd.f32 %v2019, %v2028
      %v2037 = vadd.f32 %v2020, %v2029
      %v2038 = vadd.f32 %v2021, %v2030
      %v2039 = vadd.f32 %v2022, %v2031
      %v2040 = vadd.f32 %v2023, %v2032
      %v2041 = vadd.f32 %v2024, %v2033
      %v2042 = vadd.f32 %v2025, %v2034
      %v2043 = vadd.f32 %v2026, %v2035
      %vm2044 = vcmp.eq.s32.totalorder %v1846, 7
      %vm2045 = vcmp.eq.s32.totalorder %v1847, 7
      %vm2046 = vcmp.eq.s32.totalorder %v1848, 7
      %vm2047 = vcmp.eq.s32.totalorder %v1849, 7
      %vm2048 = vcmp.eq.s32.totalorder %v1850, 7
      %vm2049 = vcmp.eq.s32.totalorder %v1851, 7
      %vm2050 = vcmp.eq.s32.totalorder %v1852, 7
      %vm2051 = vcmp.eq.s32.totalorder %v1853, 7
      %v2052 = vsel %vm2044, 1, 0
      %v2053 = vsel %vm2045, 1, 0
      %v2054 = vsel %vm2046, 1, 0
      %v2055 = vsel %vm2047, 1, 0
      %v2056 = vsel %vm2048, 1, 0
      %v2057 = vsel %vm2049, 1, 0
      %v2058 = vsel %vm2050, 1, 0
      %v2059 = vsel %vm2051, 1, 0
      %vm2060 = vcmp.eq.s32.totalorder %v2052, 1
      %vm2061 = vcmp.eq.s32.totalorder %v2053, 1
      %vm2062 = vcmp.eq.s32.totalorder %v2054, 1
      %vm2063 = vcmp.eq.s32.totalorder %v2055, 1
      %vm2064 = vcmp.eq.s32.totalorder %v2056, 1
      %vm2065 = vcmp.eq.s32.totalorder %v2057, 1
      %vm2066 = vcmp.eq.s32.totalorder %v2058, 1
      %vm2067 = vcmp.eq.s32.totalorder %v2059, 1
      %v2068 = vsel %vm2060, 0.0, %v2036
      %v2069 = vsel %vm2061, 0.0, %v2037
      %v2070 = vsel %vm2062, 0.0, %v2038
      %v2071 = vsel %vm2063, 0.0, %v2039
      %v2072 = vsel %vm2064, 0.0, %v2040
      %v2073 = vsel %vm2065, 0.0, %v2041
      %v2074 = vsel %vm2066, 0.0, %v2042
      %v2075 = vsel %vm2067, 0.0, %v2043
      %v2076 = vadd.f32 %v1986, %v2068
      %v2077 = vadd.f32 %v1987, %v2069
      %v2078 = vadd.f32 %v1988, %v2070
      %v2079 = vadd.f32 %v1989, %v2071
      %v2080 = vadd.f32 %v1990, %v2072
      %v2081 = vadd.f32 %v1991, %v2073
      %v2082 = vadd.f32 %v1992, %v2074
      %v2083 = vadd.f32 %v1993, %v2075
      %v2084 = vadd.f32 %v2076, %v1672
      %v2085 = vadd.f32 %v2077, %v1672
      %v2086 = vadd.f32 %v2078, %v1672
      %v2087 = vadd.f32 %v2079, %v1672
      %v2088 = vadd.f32 %v2080, %v1672
      %v2089 = vadd.f32 %v2081, %v1672
      %v2090 = vadd.f32 %v2082, %v1672
      %v2091 = vadd.f32 %v2083, %v1672
      %2092 = vst.msk [vmem:[%s232 + $0x100] sm:$0xff] %vm236, %v2084
      %2093 = vst.msk [vmem:[%s232 + $0x108] sm:$0xff] %vm236, %v2085
      %2094 = vst.msk [vmem:[%s232 + $0x110] sm:$0xff] %vm236, %v2086
      %2095 = vst.msk [vmem:[%s232 + $0x118] sm:$0xff] %vm236, %v2087
      %2096 = vst.msk [vmem:[%s232 + $0x120] sm:$0xff] %vm236, %v2088
      %2097 = vst.msk [vmem:[%s232 + $0x128] sm:$0xff] %vm236, %v2089
      %2098 = vst.msk [vmem:[%s232 + $0x130] sm:$0xff] %vm236, %v2090
      %2099 = vst.msk [vmem:[%s232 + $0x138] sm:$0xff] %vm236, %v2091
      %2100 = vst.msk [vmem:[#allocation4] sm:$0xff] %vm236, 0.0
      %2101 = vst.msk [vmem:[#allocation4 + $0x18] sm:$0xff] %vm236, 0.0
      %v2102 = vld [vmem:[%s217 + $0x140] sm:$0xff]
      %v2103 = vld [vmem:[%s217 + $0x148] sm:$0xff]
      %2104 = vst.msk [vmem:[#allocation4 + $0x8] sm:$0xff] %vm236, %v2102
      %2105 = vst.msk [vmem:[#allocation4 + $0x10] sm:$0xff] %vm236, %v2103
      %vm2106 = vcmp.lt.s32.totalorder %v308, 0
      %v2107 = vsub.s32 0, %v308
      %v2108 = vsel %vm2106, %v2107, %v308
      %v2109 = vshrl.u32 %v2108, 2
      %v2110 = vand.u32 %v2108, 3
      %v2111 = vsub.s32 0, %v2110
      %v2112 = vsel %vm2106, %v2111, %v2110
      %vm2113 = vcmp.lt.s32.totalorder %v309, 0
      %v2114 = vsub.s32 0, %v309
      %v2115 = vsel %vm2113, %v2114, %v309
      %v2116 = vshrl.u32 %v2115, 2
      %v2117 = vand.u32 %v2115, 3
      %v2118 = vsub.s32 0, %v2117
      %v2119 = vsel %vm2113, %v2118, %v2117
      %vm2120 = vcmp.ne.s32.totalorder %v2112, 0
      %vm2121 = vcmp.ne.s32.totalorder %v2119, 0
      %vm2122 = vcmp.lt.s32.totalorder %v2112, 0
      %vm2123 = vcmp.lt.s32.totalorder %v2119, 0
      %vm2124 = vmand %vm2122, %vm2120
      %vm2125 = vmand %vm2123, %vm2121
      %v2126 = vadd.s32 %v2112, 4
      %v2127 = vadd.s32 %v2119, 4
      %v2128 = vsel %vm2124, %v2126, %v2112
      %v2129 = vsel %vm2125, %v2127, %v2119
      %v2130 = vld [vmem:[#allocation4 + $0x3] sm:$0xff]
      %v2131 = vld [vmem:[#allocation4 + $0xb] sm:$0xff]
      %v2132 = vmul.f32 %v2130, %v759
      %v2133 = vmul.f32 %v2131, %v759
      %v2134 = vld [vmem:[#allocation4 + $0x7] sm:$0xff]
      %v2135 = vld [vmem:[#allocation4 + $0xf] sm:$0xff]
      %v2136 = vmul.f32 %v2134, %v797
      %v2137 = vmul.f32 %v2135, %v797
      %v2138 = vadd.f32 %v2132, %v2136
      %v2139 = vadd.f32 %v2133, %v2137
      %v2140 = vld [vmem:[#allocation4 + $0x13] sm:$0xff]
      %v2141 = vmul.f32 %v2131, %v867
      %v2142 = vmul.f32 %v2140, %v867
      %v2143 = vadd.f32 %v2138, %v2141
      %v2144 = vadd.f32 %v2139, %v2142
      %vm2145 = vcmp.eq.s32.totalorder %v2128, 0
      %vm2146 = vcmp.eq.s32.totalorder %v2129, 0
      %v2147 = vsel %vm2145, 1, 0
      %v2148 = vsel %vm2146, 1, 0
      %vm2149 = vcmp.eq.s32.totalorder %v2147, 1
      %vm2150 = vcmp.eq.s32.totalorder %v2148, 1
      %v2151 = vsel %vm2149, 0.0, %v2143
      %v2152 = vsel %vm2150, 0.0, %v2144
      %v2153 = vld [vmem:[#allocation4 + $0x4] sm:$0xff]
      %v2154 = vld [vmem:[#allocation4 + $0xc] sm:$0xff]
      %v2155 = vmul.f32 %v2153, %v1095
      %v2156 = vmul.f32 %v2154, %v1095
      %v2157 = vld [vmem:[#allocation4 + $0x8] sm:$0xff]
      %v2158 = vld [vmem:[#allocation4 + $0x10] sm:$0xff]
      %v2159 = vmul.f32 %v2157, %v1133
      %v2160 = vmul.f32 %v2158, %v1133
      %v2161 = vadd.f32 %v2155, %v2159
      %v2162 = vadd.f32 %v2156, %v2160
      %v2163 = vld [vmem:[#allocation4 + $0x14] sm:$0xff]
      %v2164 = vmul.f32 %v2154, %v1203
      %v2165 = vmul.f32 %v2163, %v1203
      %v2166 = vadd.f32 %v2161, %v2164
      %v2167 = vadd.f32 %v2162, %v2165
      %v2168 = vadd.f32 %v2151, %v2166
      %v2169 = vadd.f32 %v2152, %v2167
      %v2170 = vld [vmem:[#allocation4 + $0x5] sm:$0xff]
      %v2171 = vld [vmem:[#allocation4 + $0xd] sm:$0xff]
      %v2172 = vmul.f32 %v2170, %v1335
      %v2173 = vmul.f32 %v2171, %v1335
      %v2174 = vld [vmem:[#allocation4 + $0x9] sm:$0xff]
      %v2175 = vld [vmem:[#allocation4 + $0x11] sm:$0xff]
      %v2176 = vmul.f32 %v2174, %v1373
      %v2177 = vmul.f32 %v2175, %v1373
      %v2178 = vadd.f32 %v2172, %v2176
      %v2179 = vadd.f32 %v2173, %v2177
      %v2180 = vld [vmem:[#allocation4 + $0x15] sm:$0xff]
      %v2181 = vmul.f32 %v2171, %v1443
      %v2182 = vmul.f32 %v2180, %v1443
      %v2183 = vadd.f32 %v2178, %v2181
      %v2184 = vadd.f32 %v2179, %v2182
      %vm2185 = vcmp.eq.s32.totalorder %v2128, 3
      %vm2186 = vcmp.eq.s32.totalorder %v2129, 3
      %v2187 = vsel %vm2185, 1, 0
      %v2188 = vsel %vm2186, 1, 0
      %vm2189 = vcmp.eq.s32.totalorder %v2187, 1
      %vm2190 = vcmp.eq.s32.totalorder %v2188, 1
      %v2191 = vsel %vm2189, 0.0, %v2183
      %v2192 = vsel %vm2190, 0.0, %v2184
      %v2193 = vadd.f32 %v2168, %v2191
      %v2194 = vadd.f32 %v2169, %v2192
      %v2195 = vadd.f32 %v2193, %v1672
      %v2196 = vadd.f32 %v2194, %v1672
      %2197 = vst.msk [vmem:[%s232 + $0x140] sm:$0xff] %vm236, %v2195
      %2198 = vst.msk [vmem:[%s232 + $0x148] sm:$0xff] %vm236, %v2196
      %p2199 = scmp.lt.s32.totalorder %s18, 1
      %s2200 = scalar_select %p2199, %s18, 1
      %p2201 = scmp.lt.s32.totalorder %s19, 0
      %s2202 = scalar_select %p2201, %s19, 0
      %s2203 = smul.addr %s2200, 42
      %s2204 = sadd.s32 %s2202, %s2203
      %s2205 = smul.addr %s2204, 8
      %s2206 = scalar_lea.vmem %s3, %s2205
      // Predicated region
      $region33: #{dwconv_forward.1} parent=31 // pred_check
        %p2207 = pneg %p126
      $region34: #{dwconv_forward.1} parent=31 // pred_check_branch
        %2209 = sbr.rel (%p2207) target = $region36
      $region35: #{dwconv_forward.1} parent=31 // pred_region
        _
      $region36: #{dwconv_forward.1} parent=31 // pred_fallthru
        _
    $region32: #{dwconv_forward.1} parent=5 // pred_fallthru
      _
    %p2210 = scmp.le.s32.totalorder 2, %s9
    // Predicated region
    $region37: #{dwconv_forward.1} parent=5 // pred_check
      %p2211 = pneg %p2210
    $region38: #{dwconv_forward.1} parent=5 // pred_check_branch
      %2213 = sbr.rel (%p2211) target = $region40
    $region39: #{dwconv_forward.1} parent=5 // pred_region
      %s2214 = ssub.s32 %s9, 2
      // Predicated region
      $region41: #{dwconv_forward.1} parent=39 // pred_check
        %p2215 = pneg %p132
      $region42: #{dwconv_forward.1} parent=39 // pred_check_branch
        %2217 = sbr.rel (%p2215) target = $region44
      $region43: #{dwconv_forward.1} parent=39 // pred_region
        %p2218 = scmp.lt.s32.totalorder %s20, 1
        %s2219 = scalar_select %p2218, %s20, 1
        %p2220 = scmp.lt.s32.totalorder %s21, 0
        %s2221 = scalar_select %p2220, %s21, 0
        %s2222 = smul.addr %s2219, 42
        %s2223 = sadd.s32 %s2221, %s2222
        %s2224 = smul.addr %s2223, 8
        %s2225 = scalar_lea.vmem %s3, %s2224
      $region44: #{dwconv_forward.1} parent=39 // pred_fallthru
        _
    $region40: #{dwconv_forward.1} parent=5 // pred_fallthru
      _
  $region6: #{dwconv_forward.1} parent=0 // loop_footer
    %s13 = sadd.s32 1, %s9
  $region7: #{dwconv_forward.1} parent=0 // loop_footer_branch
    %8 = sbr.rel target = $region3
  $region8: #{dwconv_forward.1} parent=0 // loop_exit
    _

</llo_original>
